<compile_context>
chip_gen: v7x
topology: tpu7x:2x2x1
jax: 0.10.0
libtpu: 0.0.40
codegen_flags: <defaults>
</compile_context>

<pallas_src>
import functools

import jax
import jax.numpy as jnp
from jax.experimental import pallas as pl
from jax.experimental.pallas import tpu as pltpu


def _vmem():
    return pl.BlockSpec(memory_space=pltpu.MemorySpace.VMEM)


# ---------------------------------------------------------------------------
# Kernel A: fused matmul + bias + ReLU (conv1 / conv2 on im2col'd inputs).
# Single invocation, all operands resident in VMEM, no grid.
# ---------------------------------------------------------------------------
def _matmul_bias_relu_kernel(x_ref, w_ref, b_ref, o_ref):
    y = jnp.dot(x_ref[...], w_ref[...], preferred_element_type=jnp.float32)
    o_ref[...] = jnp.maximum(y + b_ref[...], 0.0)


def pallas_matmul_bias_relu(x, w, b):
    m, k = x.shape
    k2, n = w.shape
    assert k == k2 and b.shape == (1, n)
    return pl.pallas_call(
        _matmul_bias_relu_kernel,
        out_shape=jax.ShapeDtypeStruct((m, n), jnp.float32),
        in_specs=[_vmem(), _vmem(), _vmem()],
        out_specs=_vmem(),
    )(x, w, b)


# ---------------------------------------------------------------------------
# Kernel B: fused conv3 + fc1..fc4 in a single VMEM-resident call.
#   * conv3 = one (n_pos*batch, K3) x (K3, C3) dot (full MXU row occupancy).
#   * fc1 contraction accumulates per output spatial position from static
#     sublane slices of the conv3 value; the torch NCHW .view(N,-1) flatten
#     permutation is pre-folded into the fc1 weight rows, so no reshape /
#     transpose ever happens in-kernel.
# ---------------------------------------------------------------------------
def _conv3_fc_kernel(col_ref, w3_ref, b3_ref,
                     w1_ref, b1_ref, w2_ref, b2_ref,
                     wf3_ref, bf3_ref, w4_ref, b4_ref,
                     o_ref, *, batch, n_pos):
    c3 = w3_ref.shape[1]                                   # 64 conv3 out channels
    fc1_n = w1_ref.shape[1]

    # conv3: one dot over all (position, batch) rows.  Rows are position-major
    # (row = pos*batch + n) so the per-position blocks below are contiguous.
    h3 = jnp.dot(col_ref[...], w3_ref[...], preferred_element_type=jnp.float32)
    h3 = jnp.maximum(h3 + b3_ref[...], 0.0)                # (n_pos*batch, c3)

    # fc1: sum_p  h3[pos block p] @ fc1_w[rows p*c3:(p+1)*c3]  (perm pre-folded).
    acc = jnp.zeros((batch, fc1_n), dtype=jnp.float32)
    for p in range(n_pos):                                 # static unroll (=4), dots only
        acc = acc + jnp.dot(h3[p * batch:(p + 1) * batch, :],
                            w1_ref[p * c3:(p + 1) * c3, :],
                            preferred_element_type=jnp.float32)
    h = jnp.maximum(acc + b1_ref[...], 0.0)                                          # fc1
    h = jnp.maximum(jnp.dot(h, w2_ref[...],
                            preferred_element_type=jnp.float32) + b2_ref[...], 0.0)   # fc2
    h = jnp.maximum(jnp.dot(h, wf3_ref[...],
                            preferred_element_type=jnp.float32) + bf3_ref[...], 0.0)  # fc3
    o_ref[...] = (jnp.dot(h, w4_ref[...],
                          preferred_element_type=jnp.float32) + b4_ref[...])          # fc4


def pallas_conv3_fc(col3, pk, *, batch, n_pos):
    n_actions = pk["fc4_w"].shape[1]
    kernel = functools.partial(_conv3_fc_kernel, batch=batch, n_pos=n_pos)
    return pl.pallas_call(
        kernel,
        out_shape=jax.ShapeDtypeStruct((batch, n_actions), jnp.float32),
        in_specs=[_vmem()] * 11,
        out_specs=_vmem(),
    )(col3, pk["c3_w"], pk["c3_b"], pk["fc1_w"], pk["fc1_b"],
      pk["fc2_w"], pk["fc2_b"], pk["fc3_w"], pk["fc3_b"],
      pk["fc4_w"], pk["fc4_b"])


# ---------------------------------------------------------------------------
# Plain-JAX glue: channel-last im2col (cheap XLA slicing; no extra transposes).
# pos_major=True emits rows ordered (oh, ow, n) — the ordering the fused
# kernel wants — directly inside the im2col producer fusion.
# ---------------------------------------------------------------------------
def _im2col_nhwc(x, kh, kw, stride, pos_major=False):
    """x: (N, H, W, C) -> (rows, KH*KW*C) with columns ordered (i, j, c)."""
    n, h, w, c = x.shape
    oh = (h - kh) // stride + 1
    ow = (w - kw) // stride + 1
    cols = []
    for i in range(kh):
        for j in range(kw):
            cols.append(x[:, i:i + stride * oh:stride, j:j + stride * ow:stride, :])
    col = jnp.stack(cols, axis=3)                       # (N, OH, OW, KH*KW, C)
    if pos_major:
        col = jnp.transpose(col, (1, 2, 0, 3, 4))       # (OH, OW, N, KH*KW, C)
        return col.reshape(oh * ow * n, kh * kw * c), oh, ow
    return col.reshape(n * oh * ow, kh * kw * c), oh, ow


# ---------------------------------------------------------------------------
# Deterministic canonical (PyTorch-layout) parameters.
# ---------------------------------------------------------------------------
def _uniform(key, shape, fan_in):
    bound = 1.0 / jnp.sqrt(jnp.float32(fan_in))
    return jax.random.uniform(key, shape, jnp.float32, -bound, bound)


def init_cdqn_params(key, input_shape, n_actions):
    c_in = input_shape[0]
    params = {}
    conv_cfg = [("conv1", c_in, 32, 8, 3), ("conv2", 32, 64, 4, 2),
                ("conv3", 64, 64, 3, 1)]
    for name, ic, oc, k, _ in conv_cfg:
        key, k1, k2 = jax.random.split(key, 3)
        fan_in = ic * k * k
        params[name + "_w"] = _uniform(k1, (oc, ic, k, k), fan_in)   # torch OIHW
        params[name + "_b"] = _uniform(k2, (oc,), fan_in)

    h, w = input_shape[1], input_shape[2]
    for _, _, _, k, s in conv_cfg:
        h = (h - k) // s + 1
        w = (w - k) // s + 1
    conv_out_size = 64 * h * w

    fc_cfg = [("fc1", conv_out_size, 64), ("fc2", 64, 64),
              ("fc3", 64, 128), ("fc4", 128, n_actions)]
    for name, fin, fout in fc_cfg:
        key, k1, k2 = jax.random.split(key, 3)
        params[name + "_w"] = _uniform(k1, (fin, fout), fin)         # (in, out)
        params[name + "_b"] = _uniform(k2, (fout,), fin)
    return params, conv_out_size, (h, w)


# ---------------------------------------------------------------------------
# One-time host-side weight repack: channel-last conv weights (NO lane padding)
# and the torch NCHW .view(N,-1) permutation folded into fc1's weight rows.
# ---------------------------------------------------------------------------
def _pack_conv_w(w):
    oc, ic, kh, kw = w.shape
    return jnp.transpose(w, (2, 3, 1, 0)).reshape(kh * kw * ic, oc)  # rows (i,j,c)


def _pack_bias(b):
    return b.reshape(1, -1)


def pack_params(params, conv3_hw):
    oh3, ow3 = conv3_hw
    n_pos = oh3 * ow3
    p = {}
    p["c1_w"] = _pack_conv_w(params["conv1_w"])
    p["c1_b"] = _pack_bias(params["conv1_b"])
    p["c2_w"] = _pack_conv_w(params["conv2_w"])
    p["c2_b"] = _pack_bias(params["conv2_b"])
    p["c3_w"] = _pack_conv_w(params["conv3_w"])
    p["c3_b"] = _pack_bias(params["conv3_b"])

    oc3 = params["conv3_w"].shape[0]                # 64
    w1 = params["fc1_w"]                            # (oc3*n_pos, 64); torch row = c*n_pos + pos
    fc1_n = w1.shape[1]
    w1 = w1.reshape(oc3, n_pos, fc1_n)              # (c, pos, j)
    w1 = jnp.transpose(w1, (1, 0, 2))               # (pos, c, j)
    p["fc1_w"] = w1.reshape(n_pos * oc3, fc1_n)     # kernel row = pos*oc3 + c
    p["fc1_b"] = _pack_bias(params["fc1_b"])
    for name in ("fc2", "fc3", "fc4"):
        p[name + "_w"] = params[name + "_w"]
        p[name + "_b"] = _pack_bias(params[name + "_b"])
    return p


# ---------------------------------------------------------------------------
# Forward pass (matches CDQN.forward, f32 throughout).
# ---------------------------------------------------------------------------
def cdqn_forward(packed, x):
    n = x.shape[0]
    c1_out = packed["c1_w"].shape[1]
    c2_out = packed["c2_w"].shape[1]

    h = jnp.transpose(x, (0, 2, 3, 1))                  # NCHW -> NHWC (one time)

    col, oh, ow = _im2col_nhwc(h, 8, 8, 3)              # conv1
    h = pallas_matmul_bias_relu(col, packed["c1_w"], packed["c1_b"])
    h = h.reshape(n, oh, ow, c1_out)

    col, oh, ow = _im2col_nhwc(h, 4, 4, 2)              # conv2
    h = pallas_matmul_bias_relu(col, packed["c2_w"], packed["c2_b"])
    h = h.reshape(n, oh, ow, c2_out)

    # conv3 im2col, emitted position-major directly (no separate transpose op)
    col, oh, ow = _im2col_nhwc(h, 3, 3, 1, pos_major=True)
    return pallas_conv3_fc(col, packed, batch=n, n_pos=oh * ow)   # conv3 + fc1..4


if __name__ == "__main__":
    key = jax.random.PRNGKey(0)
    key, pkey, xkey = jax.random.split(key, 3)

    # Small Atari-like input: batch=2, 4 frame channels, 36x36 spatial
    # (spatial: 36 -> 10 -> 4 -> 2 through the conv stack; conv_out = 256).
    input_shape = (4, 36, 36)
    n_actions = 6
    batch = 2

    params, conv_out_size, conv3_hw = init_cdqn_params(pkey, input_shape, n_actions)
    packed = pack_params(params, conv3_hw)
    x = jax.random.normal(xkey, (batch,) + input_shape, dtype=jnp.float32)

    q_values = jax.jit(cdqn_forward)(packed, x)
    jax.block_until_ready(q_values)

    assert q_values.shape == (batch, n_actions), q_values.shape
    print("KERNEL_OK")
</pallas_src>

<mosaic_0001>
module attributes {stable_mosaic.version = 11 : i64} {
  func.func @_matmul_bias_relu_kernel(%arg0: memref<200x256xf32, #tpu.memory_space<vmem>>, %arg1: memref<256x32xf32, #tpu.memory_space<vmem>>, %arg2: memref<1x32xf32, #tpu.memory_space<vmem>>, %arg3: memref<200x32xf32, #tpu.memory_space<vmem>>) attributes {dimension_semantics = [], scalar_prefetch = 0 : i64, scratch_operands = 0 : i64, tpu.core_type = #tpu.core_type<tc>} {
    %c0 = arith.constant 0 : index
    %c0_0 = arith.constant 0 : index
    %0 = vector.load %arg0[%c0, %c0_0] : memref<200x256xf32, #tpu.memory_space<vmem>>, vector<200x256xf32>
    %c0_1 = arith.constant 0 : index
    %c0_2 = arith.constant 0 : index
    %1 = vector.load %arg1[%c0_1, %c0_2] : memref<256x32xf32, #tpu.memory_space<vmem>>, vector<256x32xf32>
    %cst = arith.constant dense<0.000000e+00> : vector<200x32xf32>
    %2 = tpu.matmul %0, %1, %cst {dimension_numbers = #tpu.dot_dimension_numbers<[1], [0], [0], [1], [0, 0, 1, 1], [], []>} : vector<200x256xf32>, vector<256x32xf32>, vector<200x32xf32> -> vector<200x32xf32>
    %c0_3 = arith.constant 0 : index
    %c0_4 = arith.constant 0 : index
    %3 = vector.load %arg2[%c0_3, %c0_4] : memref<1x32xf32, #tpu.memory_space<vmem>>, vector<1x32xf32>
    %4 = vector.broadcast %3 : vector<1x32xf32> to vector<200x32xf32>
    %5 = arith.addf %2, %4 : vector<200x32xf32>
    %cst_5 = arith.constant 0.000000e+00 : f32
    %6 = vector.broadcast %cst_5 : f32 to vector<200x32xf32>
    %7 = arith.maximumf %5, %6 : vector<200x32xf32>
    %c0_6 = arith.constant 0 : index
    %c0_7 = arith.constant 0 : index
    %8 = vector.load %arg3[%c0_6, %c0_7] : memref<200x32xf32, #tpu.memory_space<vmem>>, vector<200x32xf32>
    tpu.vector_store %arg3[%c0_6, %c0_7], %7 {strides = array<i32>} : memref<200x32xf32, #tpu.memory_space<vmem>>, vector<200x32xf32>,
    return
  }
}

module attributes {stable_mosaic.version = 11 : i64} {
  func.func @_matmul_bias_relu_kernel(%arg0: memref<32x512xf32, #tpu.memory_space<vmem>>, %arg1: memref<512x64xf32, #tpu.memory_space<vmem>>, %arg2: memref<1x64xf32, #tpu.memory_space<vmem>>, %arg3: memref<32x64xf32, #tpu.memory_space<vmem>>) attributes {dimension_semantics = [], scalar_prefetch = 0 : i64, scratch_operands = 0 : i64, tpu.core_type = #tpu.core_type<tc>} {
    %c0 = arith.constant 0 : index
    %c0_0 = arith.constant 0 : index
    %0 = vector.load %arg0[%c0, %c0_0] : memref<32x512xf32, #tpu.memory_space<vmem>>, vector<32x512xf32>
    %c0_1 = arith.constant 0 : index
    %c0_2 = arith.constant 0 : index
    %1 = vector.load %arg1[%c0_1, %c0_2] : memref<512x64xf32, #tpu.memory_space<vmem>>, vector<512x64xf32>
    %cst = arith.constant dense<0.000000e+00> : vector<32x64xf32>
    %2 = tpu.matmul %0, %1, %cst {dimension_numbers = #tpu.dot_dimension_numbers<[1], [0], [0], [1], [0, 0, 1, 1], [], []>} : vector<32x512xf32>, vector<512x64xf32>, vector<32x64xf32> -> vector<32x64xf32>
    %c0_3 = arith.constant 0 : index
    %c0_4 = arith.constant 0 : index
    %3 = vector.load %arg2[%c0_3, %c0_4] : memref<1x64xf32, #tpu.memory_space<vmem>>, vector<1x64xf32>
    %4 = vector.broadcast %3 : vector<1x64xf32> to vector<32x64xf32>
    %5 = arith.addf %2, %4 : vector<32x64xf32>
    %cst_5 = arith.constant 0.000000e+00 : f32
    %6 = vector.broadcast %cst_5 : f32 to vector<32x64xf32>
    %7 = arith.maximumf %5, %6 : vector<32x64xf32>
    %c0_6 = arith.constant 0 : index
    %c0_7 = arith.constant 0 : index
    %8 = vector.load %arg3[%c0_6, %c0_7] : memref<32x64xf32, #tpu.memory_space<vmem>>, vector<32x64xf32>
    tpu.vector_store %arg3[%c0_6, %c0_7], %7 {strides = array<i32>} : memref<32x64xf32, #tpu.memory_space<vmem>>, vector<32x64xf32>,
    return
  }
}

module attributes {stable_mosaic.version = 11 : i64} {
  func.func @_conv3_fc_kernel(%arg0: memref<8x576xf32, #tpu.memory_space<vmem>>, %arg1: memref<576x64xf32, #tpu.memory_space<vmem>>, %arg2: memref<1x64xf32, #tpu.memory_space<vmem>>, %arg3: memref<256x64xf32, #tpu.memory_space<vmem>>, %arg4: memref<1x64xf32, #tpu.memory_space<vmem>>, %arg5: memref<64x64xf32, #tpu.memory_space<vmem>>, %arg6: memref<1x64xf32, #tpu.memory_space<vmem>>, %arg7: memref<64x128xf32, #tpu.memory_space<vmem>>, %arg8: memref<1x128xf32, #tpu.memory_space<vmem>>, %arg9: memref<128x6xf32, #tpu.memory_space<vmem>>, %arg10: memref<1x6xf32, #tpu.memory_space<vmem>>, %arg11: memref<2x6xf32, #tpu.memory_space<vmem>>) attributes {dimension_semantics = [], scalar_prefetch = 0 : i64, scratch_operands = 0 : i64, tpu.core_type = #tpu.core_type<tc>} {
    %c0 = arith.constant 0 : index
    %c0_0 = arith.constant 0 : index
    %0 = vector.load %arg0[%c0, %c0_0] : memref<8x576xf32, #tpu.memory_space<vmem>>, vector<8x576xf32>
    %c0_1 = arith.constant 0 : index
    %c0_2 = arith.constant 0 : index
    %1 = vector.load %arg1[%c0_1, %c0_2] : memref<576x64xf32, #tpu.memory_space<vmem>>, vector<576x64xf32>
    %cst = arith.constant dense<0.000000e+00> : vector<8x64xf32>
    %2 = tpu.matmul %0, %1, %cst {dimension_numbers = #tpu.dot_dimension_numbers<[1], [0], [0], [1], [0, 0, 1, 1], [], []>} : vector<8x576xf32>, vector<576x64xf32>, vector<8x64xf32> -> vector<8x64xf32>
    %c0_3 = arith.constant 0 : index
    %c0_4 = arith.constant 0 : index
    %3 = vector.load %arg2[%c0_3, %c0_4] : memref<1x64xf32, #tpu.memory_space<vmem>>, vector<1x64xf32>
    %4 = vector.broadcast %3 : vector<1x64xf32> to vector<8x64xf32>
    %5 = arith.addf %2, %4 : vector<8x64xf32>
    %cst_5 = arith.constant 0.000000e+00 : f32
    %6 = vector.broadcast %cst_5 : f32 to vector<8x64xf32>
    %7 = arith.maximumf %5, %6 : vector<8x64xf32>
    %cst_6 = arith.constant 0.000000e+00 : f32
    %8 = vector.broadcast %cst_6 : f32 to vector<2x64xf32>
    %9 = vector.extract_strided_slice %7 {offsets = [0, 0], sizes = [2, 64], strides = [1, 1]} : vector<8x64xf32> to vector<2x64xf32>
    %c0_7 = arith.constant 0 : index
    %c0_8 = arith.constant 0 : index
    %10 = vector.load %arg3[%c0_7, %c0_8] : memref<256x64xf32, #tpu.memory_space<vmem>>, vector<64x64xf32>
    %cst_9 = arith.constant dense<0.000000e+00> : vector<2x64xf32>
    %11 = tpu.matmul %9, %10, %cst_9 {dimension_numbers = #tpu.dot_dimension_numbers<[1], [0], [0], [1], [0, 0, 1, 1], [], []>} : vector<2x64xf32>, vector<64x64xf32>, vector<2x64xf32> -> vector<2x64xf32>
    %12 = arith.addf %8, %11 : vector<2x64xf32>
    %13 = vector.extract_strided_slice %7 {offsets = [2, 0], sizes = [2, 64], strides = [1, 1]} : vector<8x64xf32> to vector<2x64xf32>
    %c64 = arith.constant 64 : index
    %c0_10 = arith.constant 0 : index
    %14 = vector.load %arg3[%c64, %c0_10] : memref<256x64xf32, #tpu.memory_space<vmem>>, vector<64x64xf32>
    %cst_11 = arith.constant dense<0.000000e+00> : vector<2x64xf32>
    %15 = tpu.matmul %13, %14, %cst_11 {dimension_numbers = #tpu.dot_dimension_numbers<[1], [0], [0], [1], [0, 0, 1, 1], [], []>} : vector<2x64xf32>, vector<64x64xf32>, vector<2x64xf32> -> vector<2x64xf32>
    %16 = arith.addf %12, %15 : vector<2x64xf32>
    %17 = vector.extract_strided_slice %7 {offsets = [4, 0], sizes = [2, 64], strides = [1, 1]} : vector<8x64xf32> to vector<2x64xf32>
    %c128 = arith.constant 128 : index
    %c0_12 = arith.constant 0 : index
    %18 = vector.load %arg3[%c128, %c0_12] : memref<256x64xf32, #tpu.memory_space<vmem>>, vector<64x64xf32>
    %cst_13 = arith.constant dense<0.000000e+00> : vector<2x64xf32>
    %19 = tpu.matmul %17, %18, %cst_13 {dimension_numbers = #tpu.dot_dimension_numbers<[1], [0], [0], [1], [0, 0, 1, 1], [], []>} : vector<2x64xf32>, vector<64x64xf32>, vector<2x64xf32> -> vector<2x64xf32>
    %20 = arith.addf %16, %19 : vector<2x64xf32>
    %21 = vector.extract_strided_slice %7 {offsets = [6, 0], sizes = [2, 64], strides = [1, 1]} : vector<8x64xf32> to vector<2x64xf32>
    %c192 = arith.constant 192 : index
    %c0_14 = arith.constant 0 : index
    %22 = vector.load %arg3[%c192, %c0_14] : memref<256x64xf32, #tpu.memory_space<vmem>>, vector<64x64xf32>
    %cst_15 = arith.constant dense<0.000000e+00> : vector<2x64xf32>
    %23 = tpu.matmul %21, %22, %cst_15 {dimension_numbers = #tpu.dot_dimension_numbers<[1], [0], [0], [1], [0, 0, 1, 1], [], []>} : vector<2x64xf32>, vector<64x64xf32>, vector<2x64xf32> -> vector<2x64xf32>
    %24 = arith.addf %20, %23 : vector<2x64xf32>
    %c0_16 = arith.constant 0 : index
    %c0_17 = arith.constant 0 : index
    %25 = vector.load %arg4[%c0_16, %c0_17] : memref<1x64xf32, #tpu.memory_space<vmem>>, vector<1x64xf32>
    %26 = vector.broadcast %25 : vector<1x64xf32> to vector<2x64xf32>
    %27 = arith.addf %24, %26 : vector<2x64xf32>
    %cst_18 = arith.constant 0.000000e+00 : f32
    %28 = vector.broadcast %cst_18 : f32 to vector<2x64xf32>
    %29 = arith.maximumf %27, %28 : vector<2x64xf32>
    %c0_19 = arith.constant 0 : index
    %c0_20 = arith.constant 0 : index
    %30 = vector.load %arg5[%c0_19, %c0_20] : memref<64x64xf32, #tpu.memory_space<vmem>>, vector<64x64xf32>
    %cst_21 = arith.constant dense<0.000000e+00> : vector<2x64xf32>
    %31 = tpu.matmul %29, %30, %cst_21 {dimension_numbers = #tpu.dot_dimension_numbers<[1], [0], [0], [1], [0, 0, 1, 1], [], []>} : vector<2x64xf32>, vector<64x64xf32>, vector<2x64xf32> -> vector<2x64xf32>
    %c0_22 = arith.constant 0 : index
    %c0_23 = arith.constant 0 : index
    %32 = vector.load %arg6[%c0_22, %c0_23] : memref<1x64xf32, #tpu.memory_space<vmem>>, vector<1x64xf32>
    %33 = vector.broadcast %32 : vector<1x64xf32> to vector<2x64xf32>
    %34 = arith.addf %31, %33 : vector<2x64xf32>
    %cst_24 = arith.constant 0.000000e+00 : f32
    %35 = vector.broadcast %cst_24 : f32 to vector<2x64xf32>
    %36 = arith.maximumf %34, %35 : vector<2x64xf32>
    %c0_25 = arith.constant 0 : index
    %c0_26 = arith.constant 0 : index
    %37 = vector.load %arg7[%c0_25, %c0_26] : memref<64x128xf32, #tpu.memory_space<vmem>>, vector<64x128xf32>
    %cst_27 = arith.constant dense<0.000000e+00> : vector<2x128xf32>
    %38 = tpu.matmul %36, %37, %cst_27 {dimension_numbers = #tpu.dot_dimension_numbers<[1], [0], [0], [1], [0, 0, 1, 1], [], []>} : vector<2x64xf32>, vector<64x128xf32>, vector<2x128xf32> -> vector<2x128xf32>
    %c0_28 = arith.constant 0 : index
    %c0_29 = arith.constant 0 : index
    %39 = vector.load %arg8[%c0_28, %c0_29] : memref<1x128xf32, #tpu.memory_space<vmem>>, vector<1x128xf32>
    %40 = vector.broadcast %39 : vector<1x128xf32> to vector<2x128xf32>
    %41 = arith.addf %38, %40 : vector<2x128xf32>
    %cst_30 = arith.constant 0.000000e+00 : f32
    %42 = vector.broadcast %cst_30 : f32 to vector<2x128xf32>
    %43 = arith.maximumf %41, %42 : vector<2x128xf32>
    %c0_31 = arith.constant 0 : index
    %c0_32 = arith.constant 0 : index
    %44 = vector.load %arg9[%c0_31, %c0_32] : memref<128x6xf32, #tpu.memory_space<vmem>>, vector<128x6xf32>
    %cst_33 = arith.constant dense<0.000000e+00> : vector<2x6xf32>
    %45 = tpu.matmul %43, %44, %cst_33 {dimension_numbers = #tpu.dot_dimension_numbers<[1], [0], [0], [1], [0, 0, 1, 1], [], []>} : vector<2x128xf32>, vector<128x6xf32>, vector<2x6xf32> -> vector<2x6xf32>
    %c0_34 = arith.constant 0 : index
    %c0_35 = arith.constant 0 : index
    %46 = vector.load %arg10[%c0_34, %c0_35] : memref<1x6xf32, #tpu.memory_space<vmem>>, vector<1x6xf32>
    %47 = vector.broadcast %46 : vector<1x6xf32> to vector<2x6xf32>
    %48 = arith.addf %45, %47 : vector<2x6xf32>
    %c0_36 = arith.constant 0 : index
    %c0_37 = arith.constant 0 : index
    %49 = vector.load %arg11[%c0_36, %c0_37] : memref<2x6xf32, #tpu.memory_space<vmem>>, vector<2x6xf32>
    tpu.vector_store %arg11[%c0_36, %c0_37], %48 {strides = array<i32>} : memref<2x6xf32, #tpu.memory_space<vmem>>, vector<2x6xf32>,
    return
  }
}

</mosaic_0001>

<llo_original>
// kernel: cdqn_forward.3
$region0: #{cdqn_forward.3}
  #allocation0 [shape = 'u32[]', space=smem, size = 0x4, offset = 0x4, fixed_abs, tag = 'smem constant byte address 0x4 - core index']
  #allocation1 [shape = 'u32[144,128]{1,0:T(1,128)}', space=vmem, size = 0x12000, scoped, tag = 'internal scratch']
  %s0 = inlined_call_operand.vmem [shape: f32[200,256], index: 0, kind: input, shape index: {}]
  %s1 = inlined_call_operand.vmem [shape: f32[256,32], index: 1, kind: input, shape index: {}]
  %s2 = inlined_call_operand.vmem [shape: f32[1,32], index: 2, kind: input, shape index: {}]
  %s3 = inlined_call_operand.vmem [shape: f32[200,32], index: 3, kind: output, shape index: {}]
  %s4 = sld [smem:[#allocation0]]
  $region22: #{cdqn_forward.3} parent=0
    _
  %s6 = ssub.s32 1, %s4
  %s7 = scalar_select 0, %s6, %s4
  // Predicated region
  $region2: #{cdqn_forward.3} parent=0 // pred_check
    _
  $region3: #{cdqn_forward.3} parent=0 // pred_check_branch
    %9 = sbr.rel (0) target = $region5
  $region4: #{cdqn_forward.3} parent=0 // pred_region
    _
  $region5: #{cdqn_forward.3} parent=0 // pred_fallthru
    _
  // Predicated region
  $region6: #{cdqn_forward.3} parent=0 // pred_check
    _
  $region7: #{cdqn_forward.3} parent=0 // pred_check_branch
    %11 = sbr.rel (0) target = $region9
  $region8: #{cdqn_forward.3} parent=0 // pred_region
    _
  $region9: #{cdqn_forward.3} parent=0 // pred_fallthru
    _
  // Predicated region
  $region10: #{cdqn_forward.3} parent=0 // pred_check
    _
  $region11: #{cdqn_forward.3} parent=0 // pred_check_branch
    %13 = sbr.rel (0) target = $region13
  $region12: #{cdqn_forward.3} parent=0 // pred_region
    _
  $region13: #{cdqn_forward.3} parent=0 // pred_fallthru
    _
  %v14 = vld [vmem:[%s0] sm:$0xff]
  %v15 = vld [vmem:[%s0 + $0x8] sm:$0xff]
  %v16 = vld [vmem:[%s0 + $0x10] sm:$0xff]
  %v17 = vld [vmem:[%s0 + $0x18] sm:$0xff]
  %v18 = vld [vmem:[%s0 + $0x20] sm:$0xff]
  %v19 = vld [vmem:[%s0 + $0x28] sm:$0xff]
  %v20 = vld [vmem:[%s0 + $0x30] sm:$0xff]
  %v21 = vld [vmem:[%s0 + $0x38] sm:$0xff]
  %v22 = vld [vmem:[%s0 + $0x40] sm:$0xff]
  %v23 = vld [vmem:[%s0 + $0x48] sm:$0xff]
  %v24 = vld [vmem:[%s0 + $0x50] sm:$0xff]
  %v25 = vld [vmem:[%s0 + $0x58] sm:$0xff]
  %v26 = vld [vmem:[%s0 + $0x60] sm:$0xff]
  %v27 = vld [vmem:[%s0 + $0x68] sm:$0xff]
  %v28 = vld [vmem:[%s0 + $0x70] sm:$0xff]
  %v29 = vld [vmem:[%s0 + $0x78] sm:$0xff]
  %v30 = vld [vmem:[%s0 + $0x80] sm:$0xff]
  %v31 = vld [vmem:[%s0 + $0x88] sm:$0xff]
  %v32 = vld [vmem:[%s0 + $0x90] sm:$0xff]
  %v33 = vld [vmem:[%s0 + $0x98] sm:$0xff]
  %v34 = vld [vmem:[%s0 + $0xa0] sm:$0xff]
  %v35 = vld [vmem:[%s0 + $0xa8] sm:$0xff]
  %v36 = vld [vmem:[%s0 + $0xb0] sm:$0xff]
  %v37 = vld [vmem:[%s0 + $0xb8] sm:$0xff]
  %v38 = vld [vmem:[%s0 + $0xc0] sm:$0xff]
  %v39 = vld [vmem:[%s0 + $0xc8] sm:$0xff]
  %v40 = vld [vmem:[%s0 + $0xd0] sm:$0xff]
  %v41 = vld [vmem:[%s0 + $0xd8] sm:$0xff]
  %v42 = vld [vmem:[%s0 + $0xe0] sm:$0xff]
  %v43 = vld [vmem:[%s0 + $0xe8] sm:$0xff]
  %v44 = vld [vmem:[%s0 + $0xf0] sm:$0xff]
  %v45 = vld [vmem:[%s0 + $0xf8] sm:$0xff]
  %v46 = vld [vmem:[%s0 + $0x100] sm:$0xff]
  %v47 = vld [vmem:[%s0 + $0x108] sm:$0xff]
  %v48 = vld [vmem:[%s0 + $0x110] sm:$0xff]
  %v49 = vld [vmem:[%s0 + $0x118] sm:$0xff]
  %v50 = vld [vmem:[%s0 + $0x120] sm:$0xff]
  %v51 = vld [vmem:[%s0 + $0x128] sm:$0xff]
  %v52 = vld [vmem:[%s0 + $0x130] sm:$0xff]
  %v53 = vld [vmem:[%s0 + $0x138] sm:$0xff]
  %v54 = vld [vmem:[%s0 + $0x140] sm:$0xff]
  %v55 = vld [vmem:[%s0 + $0x148] sm:$0xff]
  %v56 = vld [vmem:[%s0 + $0x150] sm:$0xff]
  %v57 = vld [vmem:[%s0 + $0x158] sm:$0xff]
  %v58 = vld [vmem:[%s0 + $0x160] sm:$0xff]
  %v59 = vld [vmem:[%s0 + $0x168] sm:$0xff]
  %v60 = vld [vmem:[%s0 + $0x170] sm:$0xff]
  %v61 = vld [vmem:[%s0 + $0x178] sm:$0xff]
  %v62 = vld [vmem:[%s0 + $0x180] sm:$0xff]
  %v63 = vld [vmem:[%s0 + $0x188] sm:$0xff]
  %v64 = vld [vmem:[%s1] sm:$0xff]
  %v65 = vld [vmem:[%s1 + $0x8] sm:$0xff]
  %v66 = vld [vmem:[%s1 + $0x10] sm:$0xff]
  %v67 = vld [vmem:[%s1 + $0x18] sm:$0xff]
  %v68 = vld [vmem:[%s1 + $0x20] sm:$0xff]
  %v69 = vld [vmem:[%s1 + $0x28] sm:$0xff]
  %v70 = vld [vmem:[%s1 + $0x30] sm:$0xff]
  %v71 = vld [vmem:[%s1 + $0x38] sm:$0xff]
  %v72 = vld [vmem:[%s1 + $0x40] sm:$0xff]
  %v73 = vld [vmem:[%s1 + $0x48] sm:$0xff]
  %v74 = vld [vmem:[%s1 + $0x50] sm:$0xff]
  %v75 = vld [vmem:[%s1 + $0x58] sm:$0xff]
  %v76 = vld [vmem:[%s1 + $0x60] sm:$0xff]
  %v77 = vld [vmem:[%s1 + $0x68] sm:$0xff]
  %v78 = vld [vmem:[%s1 + $0x70] sm:$0xff]
  %v79 = vld [vmem:[%s1 + $0x78] sm:$0xff]
  %v80 = vld [vmem:[%s1 + $0x80] sm:$0xff]
  %v81 = vld [vmem:[%s1 + $0x88] sm:$0xff]
  %v82 = vld [vmem:[%s1 + $0x90] sm:$0xff]
  %v83 = vld [vmem:[%s1 + $0x98] sm:$0xff]
  %v84 = vld [vmem:[%s1 + $0xa0] sm:$0xff]
  %v85 = vld [vmem:[%s1 + $0xa8] sm:$0xff]
  %v86 = vld [vmem:[%s1 + $0xb0] sm:$0xff]
  %v87 = vld [vmem:[%s1 + $0xb8] sm:$0xff]
  %v88 = vld [vmem:[%s1 + $0xc0] sm:$0xff]
  %v89 = vld [vmem:[%s1 + $0xc8] sm:$0xff]
  %v90 = vld [vmem:[%s1 + $0xd0] sm:$0xff]
  %v91 = vld [vmem:[%s1 + $0xd8] sm:$0xff]
  %v92 = vld [vmem:[%s1 + $0xe0] sm:$0xff]
  %v93 = vld [vmem:[%s1 + $0xe8] sm:$0xff]
  %v94 = vld [vmem:[%s1 + $0xf0] sm:$0xff]
  %v95 = vld [vmem:[%s1 + $0xf8] sm:$0xff]
  %v96 = vld [vmem:[%s2] sm:$0x1]
  %v98 = vlaneseq
  %v99 = vshrl.u32 %v98, 7
  %v100 = vsub.s32 0, %v99
  %v101 = vrot.slane %v96, %v100
  %103 = vmatprep.subr.mxu0 0.0
  %104 = vmatpush1.msra.mxu0 %v64
  %105 = vmatprep.subr.mxu0 0.0
  %106 = vmatpush1.msra.mxu0 %v65
  %107 = vmatprep.subr.mxu0 0.0
  %108 = vmatpush1.msra.mxu0 %v66
  %109 = vmatprep.subr.mxu0 0.0
  %110 = vmatpush1.msra.mxu0 %v67
  %111 = vmatprep.subr.mxu0 0.0
  %112 = vmatpush1.msra.mxu0 %v68
  %113 = vmatprep.subr.mxu0 0.0
  %114 = vmatpush1.msra.mxu0 %v69
  %115 = vmatprep.subr.mxu0 0.0
  %116 = vmatpush1.msra.mxu0 %v70
  %117 = vmatprep.subr.mxu0 0.0
  %118 = vmatpush1.msra.mxu0 %v71
  %119 = vmatprep.subr.mxu0 0.0
  %120 = vmatpush1.msra.mxu0 %v72
  %121 = vmatprep.subr.mxu0 0.0
  %122 = vmatpush1.msra.mxu0 %v73
  %123 = vmatprep.subr.mxu0 0.0
  %124 = vmatpush1.msra.mxu0 %v74
  %125 = vmatprep.subr.mxu0 0.0
  %126 = vmatpush1.msra.mxu0 %v75
  %127 = vmatprep.subr.mxu0 0.0
  %128 = vmatpush1.msra.mxu0 %v76
  %129 = vmatprep.subr.mxu0 0.0
  %130 = vmatpush1.msra.mxu0 %v77
  %131 = vmatprep.subr.mxu0 0.0
  %132 = vmatpush1.msra.mxu0 %v78
  %133 = vmatprep.subr.mxu0 0.0
  %134 = vmatpush1.msra.mxu0 %v79
  %135 = vmatprep.subr.mxu0 0.0
  %136 = vmatpush1.msra.mxu0 %v80
  %137 = vmatprep.subr.mxu0 0.0
  %138 = vmatpush1.msra.mxu0 %v81
  %139 = vmatprep.subr.mxu0 0.0
  %140 = vmatpush1.msra.mxu0 %v82
  %141 = vmatprep.subr.mxu0 0.0
  %142 = vmatpush1.msra.mxu0 %v83
  %143 = vmatprep.subr.mxu0 0.0
  %144 = vmatpush1.msra.mxu0 %v84
  %145 = vmatprep.subr.mxu0 0.0
  %146 = vmatpush1.msra.mxu0 %v85
  %147 = vmatprep.subr.mxu0 0.0
  %148 = vmatpush1.msra.mxu0 %v86
  %149 = vmatprep.subr.mxu0 0.0
  %150 = vmatpush1.msra.mxu0 %v87
  %151 = vmatprep.subr.mxu0 0.0
  %152 = vmatpush1.msra.mxu0 %v88
  %153 = vmatprep.subr.mxu0 0.0
  %154 = vmatpush1.msra.mxu0 %v89
  %155 = vmatprep.subr.mxu0 0.0
  %156 = vmatpush1.msra.mxu0 %v90
  %157 = vmatprep.subr.mxu0 0.0
  %158 = vmatpush1.msra.mxu0 %v91
  %159 = vmatprep.subr.mxu0 0.0
  %160 = vmatpush1.msra.mxu0 %v92
  %161 = vmatprep.subr.mxu0 0.0
  %162 = vmatpush1.msra.mxu0 %v93
  %163 = vmatprep.subr.mxu0 0.0
  %164 = vmatpush1.msra.mxu0 %v94
  %165 = vmatprep.subr.mxu0 0.0
  %166 = vmatpush1.msra.mxu0 %v95
  %167 = vmatprep.mubr.f32.mxu0 %v15
  %168 = vmatmul.mubr.f32.gmra.mrb[0].mxu0 %v14
  %v169 = vpop.f32.mrb[0].mxu0
  %v170 = vadd.f32 %v101, %v169
  %v171 = vpop.f32.mrb[0].mxu0
  %172 = vmatprep.mubr.f32.mxu0 %v17
  %173 = vmatmul.mubr.f32.gmra.mrb[0].mxu0 %v16
  %v174 = vpop.f32.mrb[0].mxu0
  %v175 = vadd.f32 %v101, %v174
  %v176 = vpop.f32.mrb[0].mxu0
  %177 = vmatprep.mubr.f32.mxu0 %v19
  %178 = vmatmul.mubr.f32.gmra.mrb[0].mxu0 %v18
  %v179 = vpop.f32.mrb[0].mxu0
  %v180 = vadd.f32 %v101, %v179
  %v181 = vpop.f32.mrb[0].mxu0
  %182 = vmatprep.mubr.f32.mxu0 %v21
  %183 = vmatmul.mubr.f32.gmra.mrb[0].mxu0 %v20
  %v184 = vpop.f32.mrb[0].mxu0
  %v185 = vadd.f32 %v101, %v184
  %v186 = vpop.f32.mrb[0].mxu0
  %187 = vmatprep.mubr.f32.mxu0 %v23
  %188 = vmatmul.mubr.f32.gmra.mrb[0].mxu0 %v22
  %v189 = vpop.f32.mrb[0].mxu0
  %v190 = vadd.f32 %v101, %v189
  %v191 = vpop.f32.mrb[0].mxu0
  %192 = vmatprep.mubr.f32.mxu0 %v25
  %193 = vmatmul.mubr.f32.gmra.mrb[0].mxu0 %v24
  %v194 = vpop.f32.mrb[0].mxu0
  %v195 = vadd.f32 %v101, %v194
  %v196 = vpop.f32.mrb[0].mxu0
  %197 = vmatprep.mubr.f32.mxu0 %v27
  %198 = vmatmul.mubr.f32.gmra.mrb[0].mxu0 %v26
  %v199 = vpop.f32.mrb[0].mxu0
  %v200 = vadd.f32 %v101, %v199
  %v201 = vpop.f32.mrb[0].mxu0
  %202 = vmatprep.mubr.f32.mxu0 %v29
  %203 = vmatmul.mubr.f32.gmra.mrb[0].mxu0 %v28
  %v204 = vpop.f32.mrb[0].mxu0
  %v205 = vadd.f32 %v101, %v204
  %v206 = vpop.f32.mrb[0].mxu0
  %207 = vmatprep.mubr.f32.mxu0 %v31
  %208 = vmatmul.mubr.f32.gmra.mrb[0].mxu0 %v30
  %v209 = vpop.f32.mrb[0].mxu0
  %v210 = vadd.f32 %v101, %v209
  %v211 = vpop.f32.mrb[0].mxu0
  %212 = vmatprep.mubr.f32.mxu0 %v33
  %213 = vmatmul.mubr.f32.gmra.mrb[0].mxu0 %v32
  %v214 = vpop.f32.mrb[0].mxu0
  %v215 = vadd.f32 %v101, %v214
  %v216 = vpop.f32.mrb[0].mxu0
  %217 = vmatprep.mubr.f32.mxu0 %v35
  %218 = vmatmul.mubr.f32.gmra.mrb[0].mxu0 %v34
  %v219 = vpop.f32.mrb[0].mxu0
  %v220 = vadd.f32 %v101, %v219
  %v221 = vpop.f32.mrb[0].mxu0
  %222 = vmatprep.mubr.f32.mxu0 %v37
  %223 = vmatmul.mubr.f32.gmra.mrb[0].mxu0 %v36
  %v224 = vpop.f32.mrb[0].mxu0
  %v225 = vadd.f32 %v101, %v224
  %v226 = vpop.f32.mrb[0].mxu0
  %227 = vmatprep.mubr.f32.mxu0 %v39
  %228 = vmatmul.mubr.f32.gmra.mrb[0].mxu0 %v38
  %v229 = vpop.f32.mrb[0].mxu0
  %v230 = vadd.f32 %v101, %v229
  %v231 = vpop.f32.mrb[0].mxu0
  %232 = vmatprep.mubr.f32.mxu0 %v41
  %233 = vmatmul.mubr.f32.gmra.mrb[0].mxu0 %v40
  %v234 = vpop.f32.mrb[0].mxu0
  %v235 = vadd.f32 %v101, %v234
  %v236 = vpop.f32.mrb[0].mxu0
  %237 = vmatprep.mubr.f32.mxu0 %v43
  %238 = vmatmul.mubr.f32.gmra.mrb[0].mxu0 %v42
  %v239 = vpop.f32.mrb[0].mxu0
  %v240 = vadd.f32 %v101, %v239
  %v241 = vpop.f32.mrb[0].mxu0
  %242 = vmatprep.mubr.f32.mxu0 %v45
  %243 = vmatmul.mubr.f32.gmra.mrb[0].mxu0 %v44
  %v244 = vpop.f32.mrb[0].mxu0
  %v245 = vadd.f32 %v101, %v244
  %v246 = vpop.f32.mrb[0].mxu0
  %247 = vmatprep.mubr.f32.mxu0 %v47
  %248 = vmatmul.mubr.f32.gmra.mrb[0].mxu0 %v46
  %v249 = vpop.f32.mrb[0].mxu0
  %v250 = vadd.f32 %v101, %v249
  %v251 = vpop.f32.mrb[0].mxu0
  %252 = vmatprep.mubr.f32.mxu0 %v49
  %253 = vmatmul.mubr.f32.gmra.mrb[0].mxu0 %v48
  %v254 = vpop.f32.mrb[0].mxu0
  %v255 = vadd.f32 %v101, %v254
  %v256 = vpop.f32.mrb[0].mxu0
  %257 = vmatprep.mubr.f32.mxu0 %v51
  %258 = vmatmul.mubr.f32.gmra.mrb[0].mxu0 %v50
  %v259 = vpop.f32.mrb[0].mxu0
  %v260 = vadd.f32 %v101, %v259
  %v261 = vpop.f32.mrb[0].mxu0
  %262 = vmatprep.mubr.f32.mxu0 %v53
  %263 = vmatmul.mubr.f32.gmra.mrb[0].mxu0 %v52
  %v264 = vpop.f32.mrb[0].mxu0
  %v265 = vadd.f32 %v101, %v264
  %v266 = vpop.f32.mrb[0].mxu0
  %267 = vmatprep.mubr.f32.mxu0 %v55
  %268 = vmatmul.mubr.f32.gmra.mrb[0].mxu0 %v54
  %v269 = vpop.f32.mrb[0].mxu0
  %v270 = vadd.f32 %v101, %v269
  %v271 = vpop.f32.mrb[0].mxu0
  %272 = vmatprep.mubr.f32.mxu0 %v57
  %273 = vmatmul.mubr.f32.gmra.mrb[0].mxu0 %v56
  %v274 = vpop.f32.mrb[0].mxu0
  %v275 = vadd.f32 %v101, %v274
  %v276 = vpop.f32.mrb[0].mxu0
  %277 = vmatprep.mubr.f32.mxu0 %v59
  %278 = vmatmul.mubr.f32.gmra.mrb[0].mxu0 %v58
  %v279 = vpop.f32.mrb[0].mxu0
  %v280 = vadd.f32 %v101, %v279
  %v281 = vpop.f32.mrb[0].mxu0
  %282 = vmatprep.mubr.f32.mxu0 %v61
  %283 = vmatmul.mubr.f32.gmra.mrb[0].mxu0 %v60
  %v284 = vpop.f32.mrb[0].mxu0
  %v285 = vadd.f32 %v101, %v284
  %v286 = vpop.f32.mrb[0].mxu0
  %287 = vmatprep.mubr.f32.mxu0 %v63
  %288 = vmatmul.mubr.f32.gmra.mrb[0].mxu0 %v62
  %v289 = vpop.f32.mrb[0].mxu0
  %v290 = vadd.f32 %v101, %v289
  %v291 = vpop.f32.mrb[0].mxu0
  %292 = vdwg.mxu0
  %v293 = vmax.f32 %v170, 0.0
  %v294 = vmax.f32 %v175, 0.0
  %v295 = vmax.f32 %v180, 0.0
  %v296 = vmax.f32 %v185, 0.0
  %v297 = vmax.f32 %v190, 0.0
  %v298 = vmax.f32 %v195, 0.0
  %v299 = vmax.f32 %v200, 0.0
  %v300 = vmax.f32 %v205, 0.0
  %v301 = vmax.f32 %v210, 0.0
  %v302 = vmax.f32 %v215, 0.0
  %v303 = vmax.f32 %v220, 0.0
  %v304 = vmax.f32 %v225, 0.0
  %v305 = vmax.f32 %v230, 0.0
  %v306 = vmax.f32 %v235, 0.0
  %v307 = vmax.f32 %v240, 0.0
  %v308 = vmax.f32 %v245, 0.0
  %v309 = vmax.f32 %v250, 0.0
  %v310 = vmax.f32 %v255, 0.0
  %v311 = vmax.f32 %v260, 0.0
  %v312 = vmax.f32 %v265, 0.0
  %v313 = vmax.f32 %v270, 0.0
  %v314 = vmax.f32 %v275, 0.0
  %v315 = vmax.f32 %v280, 0.0
  %v316 = vmax.f32 %v285, 0.0
  %v317 = vmax.f32 %v290, 0.0
  %vm318 = vcmask 261120
  %319 = vst.msk [vmem:[%s3] sm:$0xff] %vm318, %v293
  %320 = vst.msk [vmem:[%s3 + $0x8] sm:$0xff] %vm318, %v294
  %321 = vst.msk [vmem:[%s3 + $0x10] sm:$0xff] %vm318, %v295
  %322 = vst.msk [vmem:[%s3 + $0x18] sm:$0xff] %vm318, %v296
  %323 = vst.msk [vmem:[%s3 + $0x20] sm:$0xff] %vm318, %v297
  %324 = vst.msk [vmem:[%s3 + $0x28] sm:$0xff] %vm318, %v298
  %325 = vst.msk [vmem:[%s3 + $0x30] sm:$0xff] %vm318, %v299
  %326 = vst.msk [vmem:[%s3 + $0x38] sm:$0xff] %vm318, %v300
  %327 = vst.msk [vmem:[%s3 + $0x40] sm:$0xff] %vm318, %v301
  %328 = vst.msk [vmem:[%s3 + $0x48] sm:$0xff] %vm318, %v302
  %329 = vst.msk [vmem:[%s3 + $0x50] sm:$0xff] %vm318, %v303
  %330 = vst.msk [vmem:[%s3 + $0x58] sm:$0xff] %vm318, %v304
  %331 = vst.msk [vmem:[%s3 + $0x60] sm:$0xff] %vm318, %v305
  %332 = vst.msk [vmem:[%s3 + $0x68] sm:$0xff] %vm318, %v306
  %333 = vst.msk [vmem:[%s3 + $0x70] sm:$0xff] %vm318, %v307
  %334 = vst.msk [vmem:[%s3 + $0x78] sm:$0xff] %vm318, %v308
  %335 = vst.msk [vmem:[%s3 + $0x80] sm:$0xff] %vm318, %v309
  %336 = vst.msk [vmem:[%s3 + $0x88] sm:$0xff] %vm318, %v310
  %337 = vst.msk [vmem:[%s3 + $0x90] sm:$0xff] %vm318, %v311
  %338 = vst.msk [vmem:[%s3 + $0x98] sm:$0xff] %vm318, %v312
  %339 = vst.msk [vmem:[%s3 + $0xa0] sm:$0xff] %vm318, %v313
  %340 = vst.msk [vmem:[%s3 + $0xa8] sm:$0xff] %vm318, %v314
  %341 = vst.msk [vmem:[%s3 + $0xb0] sm:$0xff] %vm318, %v315
  %342 = vst.msk [vmem:[%s3 + $0xb8] sm:$0xff] %vm318, %v316
  %343 = vst.msk [vmem:[%s3 + $0xc0] sm:$0xff] %vm318, %v317
  // Predicated region
  $region14: #{cdqn_forward.3} parent=0 // pred_check
    _
  $region15: #{cdqn_forward.3} parent=0 // pred_check_branch
    %345 = sbr.rel (0) target = $region17
  $region16: #{cdqn_forward.3} parent=0 // pred_region
    _
  $region17: #{cdqn_forward.3} parent=0 // pred_fallthru
    _
  // Predicated region
  $region18: #{cdqn_forward.3} parent=0 // pred_check
    _
  $region19: #{cdqn_forward.3} parent=0 // pred_check_branch
    %347 = sbr.rel (0) target = $region21
  $region20: #{cdqn_forward.3} parent=0 // pred_region
    _
  $region21: #{cdqn_forward.3} parent=0 // pred_fallthru
    _

// kernel: cdqn_forward.4
$region0: #{cdqn_forward.4}
  #allocation0 [shape = 'u32[]', space=smem, size = 0x4, offset = 0x4, fixed_abs, tag = 'smem constant byte address 0x4 - core index']
  #allocation1 [shape = 'u32[144,128]{1,0:T(1,128)}', space=vmem, size = 0x12000, scoped, tag = 'internal scratch']
  %s0 = inlined_call_operand.vmem [shape: f32[32,512], index: 0, kind: input, shape index: {}]
  %s1 = inlined_call_operand.vmem [shape: f32[512,64], index: 1, kind: input, shape index: {}]
  %s2 = inlined_call_operand.vmem [shape: f32[1,64], index: 2, kind: input, shape index: {}]
  %s3 = inlined_call_operand.vmem [shape: f32[32,64], index: 3, kind: output, shape index: {}]
  %s4 = sld [smem:[#allocation0]]
  $region22: #{cdqn_forward.4} parent=0
    _
  %s6 = ssub.s32 1, %s4
  %s7 = scalar_select 0, %s6, %s4
  // Predicated region
  $region2: #{cdqn_forward.4} parent=0 // pred_check
    _
  $region3: #{cdqn_forward.4} parent=0 // pred_check_branch
    %9 = sbr.rel (0) target = $region5
  $region4: #{cdqn_forward.4} parent=0 // pred_region
    _
  $region5: #{cdqn_forward.4} parent=0 // pred_fallthru
    _
  // Predicated region
  $region6: #{cdqn_forward.4} parent=0 // pred_check
    _
  $region7: #{cdqn_forward.4} parent=0 // pred_check_branch
    %11 = sbr.rel (0) target = $region9
  $region8: #{cdqn_forward.4} parent=0 // pred_region
    _
  $region9: #{cdqn_forward.4} parent=0 // pred_fallthru
    _
  // Predicated region
  $region10: #{cdqn_forward.4} parent=0 // pred_check
    _
  $region11: #{cdqn_forward.4} parent=0 // pred_check_branch
    %13 = sbr.rel (0) target = $region13
  $region12: #{cdqn_forward.4} parent=0 // pred_region
    _
  $region13: #{cdqn_forward.4} parent=0 // pred_fallthru
    _
  %v14 = vld [vmem:[%s0] sm:$0xff]
  %v15 = vld [vmem:[%s0 + $0x8] sm:$0xff]
  %v16 = vld [vmem:[%s0 + $0x10] sm:$0xff]
  %v17 = vld [vmem:[%s0 + $0x18] sm:$0xff]
  %v18 = vld [vmem:[%s0 + $0x20] sm:$0xff]
  %v19 = vld [vmem:[%s0 + $0x28] sm:$0xff]
  %v20 = vld [vmem:[%s0 + $0x30] sm:$0xff]
  %v21 = vld [vmem:[%s0 + $0x38] sm:$0xff]
  %v22 = vld [vmem:[%s0 + $0x40] sm:$0xff]
  %v23 = vld [vmem:[%s0 + $0x48] sm:$0xff]
  %v24 = vld [vmem:[%s0 + $0x50] sm:$0xff]
  %v25 = vld [vmem:[%s0 + $0x58] sm:$0xff]
  %v26 = vld [vmem:[%s0 + $0x60] sm:$0xff]
  %v27 = vld [vmem:[%s0 + $0x68] sm:$0xff]
  %v28 = vld [vmem:[%s0 + $0x70] sm:$0xff]
  %v29 = vld [vmem:[%s0 + $0x78] sm:$0xff]
  %v30 = vld [vmem:[%s1] sm:$0xff]
  %v31 = vld [vmem:[%s1 + $0x8] sm:$0xff]
  %v32 = vld [vmem:[%s1 + $0x10] sm:$0xff]
  %v33 = vld [vmem:[%s1 + $0x18] sm:$0xff]
  %v34 = vld [vmem:[%s1 + $0x20] sm:$0xff]
  %v35 = vld [vmem:[%s1 + $0x28] sm:$0xff]
  %v36 = vld [vmem:[%s1 + $0x30] sm:$0xff]
  %v37 = vld [vmem:[%s1 + $0x38] sm:$0xff]
  %v38 = vld [vmem:[%s1 + $0x40] sm:$0xff]
  %v39 = vld [vmem:[%s1 + $0x48] sm:$0xff]
  %v40 = vld [vmem:[%s1 + $0x50] sm:$0xff]
  %v41 = vld [vmem:[%s1 + $0x58] sm:$0xff]
  %v42 = vld [vmem:[%s1 + $0x60] sm:$0xff]
  %v43 = vld [vmem:[%s1 + $0x68] sm:$0xff]
  %v44 = vld [vmem:[%s1 + $0x70] sm:$0xff]
  %v45 = vld [vmem:[%s1 + $0x78] sm:$0xff]
  %v46 = vld [vmem:[%s1 + $0x80] sm:$0xff]
  %v47 = vld [vmem:[%s1 + $0x88] sm:$0xff]
  %v48 = vld [vmem:[%s1 + $0x90] sm:$0xff]
  %v49 = vld [vmem:[%s1 + $0x98] sm:$0xff]
  %v50 = vld [vmem:[%s1 + $0xa0] sm:$0xff]
  %v51 = vld [vmem:[%s1 + $0xa8] sm:$0xff]
  %v52 = vld [vmem:[%s1 + $0xb0] sm:$0xff]
  %v53 = vld [vmem:[%s1 + $0xb8] sm:$0xff]
  %v54 = vld [vmem:[%s1 + $0xc0] sm:$0xff]
  %v55 = vld [vmem:[%s1 + $0xc8] sm:$0xff]
  %v56 = vld [vmem:[%s1 + $0xd0] sm:$0xff]
  %v57 = vld [vmem:[%s1 + $0xd8] sm:$0xff]
  %v58 = vld [vmem:[%s1 + $0xe0] sm:$0xff]
  %v59 = vld [vmem:[%s1 + $0xe8] sm:$0xff]
  %v60 = vld [vmem:[%s1 + $0xf0] sm:$0xff]
  %v61 = vld [vmem:[%s1 + $0xf8] sm:$0xff]
  %v62 = vld [vmem:[%s1 + $0x100] sm:$0xff]
  %v63 = vld [vmem:[%s1 + $0x108] sm:$0xff]
  %v64 = vld [vmem:[%s1 + $0x110] sm:$0xff]
  %v65 = vld [vmem:[%s1 + $0x118] sm:$0xff]
  %v66 = vld [vmem:[%s1 + $0x120] sm:$0xff]
  %v67 = vld [vmem:[%s1 + $0x128] sm:$0xff]
  %v68 = vld [vmem:[%s1 + $0x130] sm:$0xff]
  %v69 = vld [vmem:[%s1 + $0x138] sm:$0xff]
  %v70 = vld [vmem:[%s1 + $0x140] sm:$0xff]
  %v71 = vld [vmem:[%s1 + $0x148] sm:$0xff]
  %v72 = vld [vmem:[%s1 + $0x150] sm:$0xff]
  %v73 = vld [vmem:[%s1 + $0x158] sm:$0xff]
  %v74 = vld [vmem:[%s1 + $0x160] sm:$0xff]
  %v75 = vld [vmem:[%s1 + $0x168] sm:$0xff]
  %v76 = vld [vmem:[%s1 + $0x170] sm:$0xff]
  %v77 = vld [vmem:[%s1 + $0x178] sm:$0xff]
  %v78 = vld [vmem:[%s1 + $0x180] sm:$0xff]
  %v79 = vld [vmem:[%s1 + $0x188] sm:$0xff]
  %v80 = vld [vmem:[%s1 + $0x190] sm:$0xff]
  %v81 = vld [vmem:[%s1 + $0x198] sm:$0xff]
  %v82 = vld [vmem:[%s1 + $0x1a0] sm:$0xff]
  %v83 = vld [vmem:[%s1 + $0x1a8] sm:$0xff]
  %v84 = vld [vmem:[%s1 + $0x1b0] sm:$0xff]
  %v85 = vld [vmem:[%s1 + $0x1b8] sm:$0xff]
  %v86 = vld [vmem:[%s1 + $0x1c0] sm:$0xff]
  %v87 = vld [vmem:[%s1 + $0x1c8] sm:$0xff]
  %v88 = vld [vmem:[%s1 + $0x1d0] sm:$0xff]
  %v89 = vld [vmem:[%s1 + $0x1d8] sm:$0xff]
  %v90 = vld [vmem:[%s1 + $0x1e0] sm:$0xff]
  %v91 = vld [vmem:[%s1 + $0x1e8] sm:$0xff]
  %v92 = vld [vmem:[%s1 + $0x1f0] sm:$0xff]
  %v93 = vld [vmem:[%s1 + $0x1f8] sm:$0xff]
  %v94 = vld [vmem:[%s2] sm:$0x1]
  %v96 = vlaneseq
  %v97 = vshrl.u32 %v96, 7
  %v98 = vsub.s32 0, %v97
  %v99 = vrot.slane %v94, %v98
  %101 = vmatprep.subr.mxu0 0.0
  %102 = vmatpush1.msra.mxu0 %v30
  %103 = vmatprep.subr.mxu0 0.0
  %104 = vmatpush1.msra.mxu0 %v31
  %105 = vmatprep.subr.mxu0 0.0
  %106 = vmatpush1.msra.mxu0 %v32
  %107 = vmatprep.subr.mxu0 0.0
  %108 = vmatpush1.msra.mxu0 %v33
  %109 = vmatprep.subr.mxu0 0.0
  %110 = vmatpush1.msra.mxu0 %v34
  %111 = vmatprep.subr.mxu0 0.0
  %112 = vmatpush1.msra.mxu0 %v35
  %113 = vmatprep.subr.mxu0 0.0
  %114 = vmatpush1.msra.mxu0 %v36
  %115 = vmatprep.subr.mxu0 0.0
  %116 = vmatpush1.msra.mxu0 %v37
  %117 = vmatprep.subr.mxu0 0.0
  %118 = vmatpush1.msra.mxu0 %v38
  %119 = vmatprep.subr.mxu0 0.0
  %120 = vmatpush1.msra.mxu0 %v39
  %121 = vmatprep.subr.mxu0 0.0
  %122 = vmatpush1.msra.mxu0 %v40
  %123 = vmatprep.subr.mxu0 0.0
  %124 = vmatpush1.msra.mxu0 %v41
  %125 = vmatprep.subr.mxu0 0.0
  %126 = vmatpush1.msra.mxu0 %v42
  %127 = vmatprep.subr.mxu0 0.0
  %128 = vmatpush1.msra.mxu0 %v43
  %129 = vmatprep.subr.mxu0 0.0
  %130 = vmatpush1.msra.mxu0 %v44
  %131 = vmatprep.subr.mxu0 0.0
  %132 = vmatpush1.msra.mxu0 %v45
  %133 = vmatprep.subr.mxu0 0.0
  %134 = vmatpush1.msra.mxu0 %v46
  %135 = vmatprep.subr.mxu0 0.0
  %136 = vmatpush1.msra.mxu0 %v47
  %137 = vmatprep.subr.mxu0 0.0
  %138 = vmatpush1.msra.mxu0 %v48
  %139 = vmatprep.subr.mxu0 0.0
  %140 = vmatpush1.msra.mxu0 %v49
  %141 = vmatprep.subr.mxu0 0.0
  %142 = vmatpush1.msra.mxu0 %v50
  %143 = vmatprep.subr.mxu0 0.0
  %144 = vmatpush1.msra.mxu0 %v51
  %145 = vmatprep.subr.mxu0 0.0
  %146 = vmatpush1.msra.mxu0 %v52
  %147 = vmatprep.subr.mxu0 0.0
  %148 = vmatpush1.msra.mxu0 %v53
  %149 = vmatprep.subr.mxu0 0.0
  %150 = vmatpush1.msra.mxu0 %v54
  %151 = vmatprep.subr.mxu0 0.0
  %152 = vmatpush1.msra.mxu0 %v55
  %153 = vmatprep.subr.mxu0 0.0
  %154 = vmatpush1.msra.mxu0 %v56
  %155 = vmatprep.subr.mxu0 0.0
  %156 = vmatpush1.msra.mxu0 %v57
  %157 = vmatprep.subr.mxu0 0.0
  %158 = vmatpush1.msra.mxu0 %v58
  %159 = vmatprep.subr.mxu0 0.0
  %160 = vmatpush1.msra.mxu0 %v59
  %161 = vmatprep.subr.mxu0 0.0
  %162 = vmatpush1.msra.mxu0 %v60
  %163 = vmatprep.subr.mxu0 0.0
  %164 = vmatpush1.msra.mxu0 %v61
  %165 = vmatprep.mubr.f32.mxu0 %v15
  %166 = vmatmul.mubr.f32.gmra.mrb[0].mxu0 %v14
  %v167 = vpop.f32.mrb[0].mxu0
  %v168 = vadd.f32 %v99, %v167
  %v169 = vpop.f32.mrb[0].mxu0
  %170 = vmatprep.mubr.f32.mxu0 %v19
  %171 = vmatmul.mubr.f32.gmra.mrb[0].mxu0 %v18
  %v172 = vpop.f32.mrb[0].mxu0
  %v173 = vadd.f32 %v99, %v172
  %v174 = vpop.f32.mrb[0].mxu0
  %175 = vmatprep.mubr.f32.mxu0 %v23
  %176 = vmatmul.mubr.f32.gmra.mrb[0].mxu0 %v22
  %v177 = vpop.f32.mrb[0].mxu0
  %v178 = vadd.f32 %v99, %v177
  %v179 = vpop.f32.mrb[0].mxu0
  %180 = vmatprep.mubr.f32.mxu0 %v27
  %181 = vmatmul.mubr.f32.gmra.mrb[0].mxu0 %v26
  %v182 = vpop.f32.mrb[0].mxu0
  %v183 = vadd.f32 %v99, %v182
  %v184 = vpop.f32.mrb[0].mxu0
  %185 = vdwg.mxu0
  %186 = vmatprep.subr.mxu0 0.0
  %187 = vmatpush1.msra.mxu0 %v62
  %188 = vmatprep.subr.mxu0 0.0
  %189 = vmatpush1.msra.mxu0 %v63
  %190 = vmatprep.subr.mxu0 0.0
  %191 = vmatpush1.msra.mxu0 %v64
  %192 = vmatprep.subr.mxu0 0.0
  %193 = vmatpush1.msra.mxu0 %v65
  %194 = vmatprep.subr.mxu0 0.0
  %195 = vmatpush1.msra.mxu0 %v66
  %196 = vmatprep.subr.mxu0 0.0
  %197 = vmatpush1.msra.mxu0 %v67
  %198 = vmatprep.subr.mxu0 0.0
  %199 = vmatpush1.msra.mxu0 %v68
  %200 = vmatprep.subr.mxu0 0.0
  %201 = vmatpush1.msra.mxu0 %v69
  %202 = vmatprep.subr.mxu0 0.0
  %203 = vmatpush1.msra.mxu0 %v70
  %204 = vmatprep.subr.mxu0 0.0
  %205 = vmatpush1.msra.mxu0 %v71
  %206 = vmatprep.subr.mxu0 0.0
  %207 = vmatpush1.msra.mxu0 %v72
  %208 = vmatprep.subr.mxu0 0.0
  %209 = vmatpush1.msra.mxu0 %v73
  %210 = vmatprep.subr.mxu0 0.0
  %211 = vmatpush1.msra.mxu0 %v74
  %212 = vmatprep.subr.mxu0 0.0
  %213 = vmatpush1.msra.mxu0 %v75
  %214 = vmatprep.subr.mxu0 0.0
  %215 = vmatpush1.msra.mxu0 %v76
  %216 = vmatprep.subr.mxu0 0.0
  %217 = vmatpush1.msra.mxu0 %v77
  %218 = vmatprep.subr.mxu0 0.0
  %219 = vmatpush1.msra.mxu0 %v78
  %220 = vmatprep.subr.mxu0 0.0
  %221 = vmatpush1.msra.mxu0 %v79
  %222 = vmatprep.subr.mxu0 0.0
  %223 = vmatpush1.msra.mxu0 %v80
  %224 = vmatprep.subr.mxu0 0.0
  %225 = vmatpush1.msra.mxu0 %v81
  %226 = vmatprep.subr.mxu0 0.0
  %227 = vmatpush1.msra.mxu0 %v82
  %228 = vmatprep.subr.mxu0 0.0
  %229 = vmatpush1.msra.mxu0 %v83
  %230 = vmatprep.subr.mxu0 0.0
  %231 = vmatpush1.msra.mxu0 %v84
  %232 = vmatprep.subr.mxu0 0.0
  %233 = vmatpush1.msra.mxu0 %v85
  %234 = vmatprep.subr.mxu0 0.0
  %235 = vmatpush1.msra.mxu0 %v86
  %236 = vmatprep.subr.mxu0 0.0
  %237 = vmatpush1.msra.mxu0 %v87
  %238 = vmatprep.subr.mxu0 0.0
  %239 = vmatpush1.msra.mxu0 %v88
  %240 = vmatprep.subr.mxu0 0.0
  %241 = vmatpush1.msra.mxu0 %v89
  %242 = vmatprep.subr.mxu0 0.0
  %243 = vmatpush1.msra.mxu0 %v90
  %244 = vmatprep.subr.mxu0 0.0
  %245 = vmatpush1.msra.mxu0 %v91
  %246 = vmatprep.subr.mxu0 0.0
  %247 = vmatpush1.msra.mxu0 %v92
  %248 = vmatprep.subr.mxu0 0.0
  %249 = vmatpush1.msra.mxu0 %v93
  %250 = vmatprep.mubr.f32.mxu0 %v17
  %251 = vmatmul.mubr.f32.gmra.mrb[0].mxu0 %v16
  %v252 = vpop.f32.mrb[0].mxu0
  %v253 = vadd.f32 %v168, %v252
  %v254 = vpop.f32.mrb[0].mxu0
  %255 = vmatprep.mubr.f32.mxu0 %v21
  %256 = vmatmul.mubr.f32.gmra.mrb[0].mxu0 %v20
  %v257 = vpop.f32.mrb[0].mxu0
  %v258 = vadd.f32 %v173, %v257
  %v259 = vpop.f32.mrb[0].mxu0
  %260 = vmatprep.mubr.f32.mxu0 %v25
  %261 = vmatmul.mubr.f32.gmra.mrb[0].mxu0 %v24
  %v262 = vpop.f32.mrb[0].mxu0
  %v263 = vadd.f32 %v178, %v262
  %v264 = vpop.f32.mrb[0].mxu0
  %265 = vmatprep.mubr.f32.mxu0 %v29
  %266 = vmatmul.mubr.f32.gmra.mrb[0].mxu0 %v28
  %v267 = vpop.f32.mrb[0].mxu0
  %v268 = vadd.f32 %v183, %v267
  %v269 = vpop.f32.mrb[0].mxu0
  %270 = vdwg.mxu0
  %v271 = vmax.f32 %v253, 0.0
  %v272 = vmax.f32 %v258, 0.0
  %v273 = vmax.f32 %v263, 0.0
  %v274 = vmax.f32 %v268, 0.0
  %vm275 = vcmask 523264
  %276 = vst.msk [vmem:[%s3] sm:$0xff] %vm275, %v271
  %277 = vst.msk [vmem:[%s3 + $0x8] sm:$0xff] %vm275, %v272
  %278 = vst.msk [vmem:[%s3 + $0x10] sm:$0xff] %vm275, %v273
  %279 = vst.msk [vmem:[%s3 + $0x18] sm:$0xff] %vm275, %v274
  // Predicated region
  $region14: #{cdqn_forward.4} parent=0 // pred_check
    _
  $region15: #{cdqn_forward.4} parent=0 // pred_check_branch
    %281 = sbr.rel (0) target = $region17
  $region16: #{cdqn_forward.4} parent=0 // pred_region
    _
  $region17: #{cdqn_forward.4} parent=0 // pred_fallthru
    _
  // Predicated region
  $region18: #{cdqn_forward.4} parent=0 // pred_check
    _
  $region19: #{cdqn_forward.4} parent=0 // pred_check_branch
    %283 = sbr.rel (0) target = $region21
  $region20: #{cdqn_forward.4} parent=0 // pred_region
    _
  $region21: #{cdqn_forward.4} parent=0 // pred_fallthru
    _

// kernel: cdqn_forward.5
$region0: #{cdqn_forward.5}
  #allocation0 [shape = 'u32[]', space=smem, size = 0x4, offset = 0x4, fixed_abs, tag = 'smem constant byte address 0x4 - core index']
  #allocation1 [shape = 'u32[144,128]{1,0:T(1,128)}', space=vmem, size = 0x12000, scoped, tag = 'internal scratch']
  %s0 = inlined_call_operand.vmem [shape: f32[8,576], index: 0, kind: input, shape index: {}]
  %s1 = inlined_call_operand.vmem [shape: f32[576,64], index: 1, kind: input, shape index: {}]
  %s2 = inlined_call_operand.vmem [shape: f32[1,64], index: 2, kind: input, shape index: {}]
  %s3 = inlined_call_operand.vmem [shape: f32[256,64], index: 3, kind: input, shape index: {}]
  %s4 = inlined_call_operand.vmem [shape: f32[1,64], index: 4, kind: input, shape index: {}]
  %s5 = inlined_call_operand.vmem [shape: f32[64,64], index: 5, kind: input, shape index: {}]
  %s6 = inlined_call_operand.vmem [shape: f32[1,64], index: 6, kind: input, shape index: {}]
  %s7 = inlined_call_operand.vmem [shape: f32[64,128], index: 7, kind: input, shape index: {}]
  %s8 = inlined_call_operand.vmem [shape: f32[1,128], index: 8, kind: input, shape index: {}]
  %s9 = inlined_call_operand.vmem [shape: f32[128,6], index: 9, kind: input, shape index: {}]
  %s10 = inlined_call_operand.vmem [shape: f32[1,6], index: 10, kind: input, shape index: {}]
  %s11 = inlined_call_operand.hbm [shape: f32[2,6], index: 11, kind: output, shape index: {}]
  %s12 = sld [smem:[#allocation0]]
  $region54: #{cdqn_forward.5} parent=0
    _
  %s14 = ssub.s32 1, %s12
  %s15 = scalar_select 0, %s14, %s12
  $region1: #{cdqn_forward.5} parent=0
    #allocation2 [shape = 'u8[1024]{0}', space=vmem, size = 0x400, scoped, tag = 'output window, operand 0, single buffered']
    #allocation3 [shape = 's32[1]{0}', space=sflag, size = 0x4, scoped, tag = 'scoped memory for cdqn_forward.5']
    %16 = vsyncpa [#allocation3], 0
    // Predicated region
    $region2: #{cdqn_forward.5} parent=1 // pred_check
      _
    $region3: #{cdqn_forward.5} parent=1 // pred_check_branch
      %18 = sbr.rel (0) target = $region5
    $region4: #{cdqn_forward.5} parent=1 // pred_region
      _
    $region5: #{cdqn_forward.5} parent=1 // pred_fallthru
      _
    // Predicated region
    $region6: #{cdqn_forward.5} parent=1 // pred_check
      _
    $region7: #{cdqn_forward.5} parent=1 // pred_check_branch
      %20 = sbr.rel (0) target = $region9
    $region8: #{cdqn_forward.5} parent=1 // pred_region
      _
    $region9: #{cdqn_forward.5} parent=1 // pred_fallthru
      _
    // Predicated region
    $region10: #{cdqn_forward.5} parent=1 // pred_check
      _
    $region11: #{cdqn_forward.5} parent=1 // pred_check_branch
      %22 = sbr.rel (0) target = $region13
    $region12: #{cdqn_forward.5} parent=1 // pred_region
      _
    $region13: #{cdqn_forward.5} parent=1 // pred_fallthru
      _
    // Predicated region
    $region14: #{cdqn_forward.5} parent=1 // pred_check
      _
    $region15: #{cdqn_forward.5} parent=1 // pred_check_branch
      %24 = sbr.rel (0) target = $region17
    $region16: #{cdqn_forward.5} parent=1 // pred_region
      _
    $region17: #{cdqn_forward.5} parent=1 // pred_fallthru
      _
    // Predicated region
    $region18: #{cdqn_forward.5} parent=1 // pred_check
      _
    $region19: #{cdqn_forward.5} parent=1 // pred_check_branch
      %26 = sbr.rel (0) target = $region21
    $region20: #{cdqn_forward.5} parent=1 // pred_region
      _
    $region21: #{cdqn_forward.5} parent=1 // pred_fallthru
      _
    // Predicated region
    $region22: #{cdqn_forward.5} parent=1 // pred_check
      _
    $region23: #{cdqn_forward.5} parent=1 // pred_check_branch
      %28 = sbr.rel (0) target = $region25
    $region24: #{cdqn_forward.5} parent=1 // pred_region
      _
    $region25: #{cdqn_forward.5} parent=1 // pred_fallthru
      _
    // Predicated region
    $region26: #{cdqn_forward.5} parent=1 // pred_check
      _
    $region27: #{cdqn_forward.5} parent=1 // pred_check_branch
      %30 = sbr.rel (0) target = $region29
    $region28: #{cdqn_forward.5} parent=1 // pred_region
      _
    $region29: #{cdqn_forward.5} parent=1 // pred_fallthru
      _
    // Predicated region
    $region30: #{cdqn_forward.5} parent=1 // pred_check
      _
    $region31: #{cdqn_forward.5} parent=1 // pred_check_branch
      %32 = sbr.rel (0) target = $region33
    $region32: #{cdqn_forward.5} parent=1 // pred_region
      _
    $region33: #{cdqn_forward.5} parent=1 // pred_fallthru
      _
    // Predicated region
    $region34: #{cdqn_forward.5} parent=1 // pred_check
      _
    $region35: #{cdqn_forward.5} parent=1 // pred_check_branch
      %34 = sbr.rel (0) target = $region37
    $region36: #{cdqn_forward.5} parent=1 // pred_region
      _
    $region37: #{cdqn_forward.5} parent=1 // pred_fallthru
      _
    // Predicated region
    $region38: #{cdqn_forward.5} parent=1 // pred_check
      _
    $region39: #{cdqn_forward.5} parent=1 // pred_check_branch
      %36 = sbr.rel (0) target = $region41
    $region40: #{cdqn_forward.5} parent=1 // pred_region
      _
    $region41: #{cdqn_forward.5} parent=1 // pred_fallthru
      _
    // Predicated region
    $region42: #{cdqn_forward.5} parent=1 // pred_check
      _
    $region43: #{cdqn_forward.5} parent=1 // pred_check_branch
      %38 = sbr.rel (0) target = $region45
    $region44: #{cdqn_forward.5} parent=1 // pred_region
      _
    $region45: #{cdqn_forward.5} parent=1 // pred_fallthru
      _
    %v39 = vld [vmem:[%s0] sm:$0xff]
    %v40 = vld [vmem:[%s0 + $0x8] sm:$0xff]
    %v41 = vld [vmem:[%s0 + $0x10] sm:$0xff]
    %v42 = vld [vmem:[%s0 + $0x18] sm:$0xff]
    %v43 = vld [vmem:[%s0 + $0x20] sm:$0xff]
    %v44 = vld [vmem:[%s1] sm:$0xff]
    %v45 = vld [vmem:[%s1 + $0x8] sm:$0xff]
    %v46 = vld [vmem:[%s1 + $0x10] sm:$0xff]
    %v47 = vld [vmem:[%s1 + $0x18] sm:$0xff]
    %v48 = vld [vmem:[%s1 + $0x20] sm:$0xff]
    %v49 = vld [vmem:[%s1 + $0x28] sm:$0xff]
    %v50 = vld [vmem:[%s1 + $0x30] sm:$0xff]
    %v51 = vld [vmem:[%s1 + $0x38] sm:$0xff]
    %v52 = vld [vmem:[%s1 + $0x40] sm:$0xff]
    %v53 = vld [vmem:[%s1 + $0x48] sm:$0xff]
    %v54 = vld [vmem:[%s1 + $0x50] sm:$0xff]
    %v55 = vld [vmem:[%s1 + $0x58] sm:$0xff]
    %v56 = vld [vmem:[%s1 + $0x60] sm:$0xff]
    %v57 = vld [vmem:[%s1 + $0x68] sm:$0xff]
    %v58 = vld [vmem:[%s1 + $0x70] sm:$0xff]
    %v59 = vld [vmem:[%s1 + $0x78] sm:$0xff]
    %v60 = vld [vmem:[%s1 + $0x80] sm:$0xff]
    %v61 = vld [vmem:[%s1 + $0x88] sm:$0xff]
    %v62 = vld [vmem:[%s1 + $0x90] sm:$0xff]
    %v63 = vld [vmem:[%s1 + $0x98] sm:$0xff]
    %v64 = vld [vmem:[%s1 + $0xa0] sm:$0xff]
    %v65 = vld [vmem:[%s1 + $0xa8] sm:$0xff]
    %v66 = vld [vmem:[%s1 + $0xb0] sm:$0xff]
    %v67 = vld [vmem:[%s1 + $0xb8] sm:$0xff]
    %v68 = vld [vmem:[%s1 + $0xc0] sm:$0xff]
    %v69 = vld [vmem:[%s1 + $0xc8] sm:$0xff]
    %v70 = vld [vmem:[%s1 + $0xd0] sm:$0xff]
    %v71 = vld [vmem:[%s1 + $0xd8] sm:$0xff]
    %v72 = vld [vmem:[%s1 + $0xe0] sm:$0xff]
    %v73 = vld [vmem:[%s1 + $0xe8] sm:$0xff]
    %v74 = vld [vmem:[%s1 + $0xf0] sm:$0xff]
    %v75 = vld [vmem:[%s1 + $0xf8] sm:$0xff]
    %v76 = vld [vmem:[%s1 + $0x100] sm:$0xff]
    %v77 = vld [vmem:[%s1 + $0x108] sm:$0xff]
    %v78 = vld [vmem:[%s1 + $0x110] sm:$0xff]
    %v79 = vld [vmem:[%s1 + $0x118] sm:$0xff]
    %v80 = vld [vmem:[%s1 + $0x120] sm:$0xff]
    %v81 = vld [vmem:[%s1 + $0x128] sm:$0xff]
    %v82 = vld [vmem:[%s1 + $0x130] sm:$0xff]
    %v83 = vld [vmem:[%s1 + $0x138] sm:$0xff]
    %v84 = vld [vmem:[%s1 + $0x140] sm:$0xff]
    %v85 = vld [vmem:[%s1 + $0x148] sm:$0xff]
    %v86 = vld [vmem:[%s1 + $0x150] sm:$0xff]
    %v87 = vld [vmem:[%s1 + $0x158] sm:$0xff]
    %v88 = vld [vmem:[%s1 + $0x160] sm:$0xff]
    %v89 = vld [vmem:[%s1 + $0x168] sm:$0xff]
    %v90 = vld [vmem:[%s1 + $0x170] sm:$0xff]
    %v91 = vld [vmem:[%s1 + $0x178] sm:$0xff]
    %v92 = vld [vmem:[%s1 + $0x180] sm:$0xff]
    %v93 = vld [vmem:[%s1 + $0x188] sm:$0xff]
    %v94 = vld [vmem:[%s1 + $0x190] sm:$0xff]
    %v95 = vld [vmem:[%s1 + $0x198] sm:$0xff]
    %v96 = vld [vmem:[%s1 + $0x1a0] sm:$0xff]
    %v97 = vld [vmem:[%s1 + $0x1a8] sm:$0xff]
    %v98 = vld [vmem:[%s1 + $0x1b0] sm:$0xff]
    %v99 = vld [vmem:[%s1 + $0x1b8] sm:$0xff]
    %v100 = vld [vmem:[%s1 + $0x1c0] sm:$0xff]
    %v101 = vld [vmem:[%s1 + $0x1c8] sm:$0xff]
    %v102 = vld [vmem:[%s1 + $0x1d0] sm:$0xff]
    %v103 = vld [vmem:[%s1 + $0x1d8] sm:$0xff]
    %v104 = vld [vmem:[%s1 + $0x1e0] sm:$0xff]
    %v105 = vld [vmem:[%s1 + $0x1e8] sm:$0xff]
    %v106 = vld [vmem:[%s1 + $0x1f0] sm:$0xff]
    %v107 = vld [vmem:[%s1 + $0x1f8] sm:$0xff]
    %v108 = vld [vmem:[%s1 + $0x200] sm:$0xff]
    %v109 = vld [vmem:[%s1 + $0x208] sm:$0xff]
    %v110 = vld [vmem:[%s1 + $0x210] sm:$0xff]
    %v111 = vld [vmem:[%s1 + $0x218] sm:$0xff]
    %v112 = vld [vmem:[%s1 + $0x220] sm:$0xff]
    %v113 = vld [vmem:[%s1 + $0x228] sm:$0xff]
    %v114 = vld [vmem:[%s1 + $0x230] sm:$0xff]
    %v115 = vld [vmem:[%s1 + $0x238] sm:$0xff]
    %v116 = vld [vmem:[%s2] sm:$0x1]
    %v118 = vlaneseq
    %v119 = vshrl.u32 %v118, 7
    %v120 = vsub.s32 0, %v119
    %v121 = vrot.slane %v116, %v120
    %vm123 = vcmask 523264
    %v125 = vsel %vm123, %v43, 0
    %127 = vmatprep.subr.mxu0 0.0
    %128 = vmatpush1.msra.mxu0 %v44
    %129 = vmatprep.subr.mxu0 0.0
    %130 = vmatpush1.msra.mxu0 %v45
    %131 = vmatprep.subr.mxu0 0.0
    %132 = vmatpush1.msra.mxu0 %v46
    %133 = vmatprep.subr.mxu0 0.0
    %134 = vmatpush1.msra.mxu0 %v47
    %135 = vmatprep.subr.mxu0 0.0
    %136 = vmatpush1.msra.mxu0 %v48
    %137 = vmatprep.subr.mxu0 0.0
    %138 = vmatpush1.msra.mxu0 %v49
    %139 = vmatprep.subr.mxu0 0.0
    %140 = vmatpush1.msra.mxu0 %v50
    %141 = vmatprep.subr.mxu0 0.0
    %142 = vmatpush1.msra.mxu0 %v51
    %143 = vmatprep.subr.mxu0 0.0
    %144 = vmatpush1.msra.mxu0 %v52
    %145 = vmatprep.subr.mxu0 0.0
    %146 = vmatpush1.msra.mxu0 %v53
    %147 = vmatprep.subr.mxu0 0.0
    %148 = vmatpush1.msra.mxu0 %v54
    %149 = vmatprep.subr.mxu0 0.0
    %150 = vmatpush1.msra.mxu0 %v55
    %151 = vmatprep.subr.mxu0 0.0
    %152 = vmatpush1.msra.mxu0 %v56
    %153 = vmatprep.subr.mxu0 0.0
    %154 = vmatpush1.msra.mxu0 %v57
    %155 = vmatprep.subr.mxu0 0.0
    %156 = vmatpush1.msra.mxu0 %v58
    %157 = vmatprep.subr.mxu0 0.0
    %158 = vmatpush1.msra.mxu0 %v59
    %159 = vmatprep.subr.mxu0 0.0
    %160 = vmatpush1.msra.mxu0 %v60
    %161 = vmatprep.subr.mxu0 0.0
    %162 = vmatpush1.msra.mxu0 %v61
    %163 = vmatprep.subr.mxu0 0.0
    %164 = vmatpush1.msra.mxu0 %v62
    %165 = vmatprep.subr.mxu0 0.0
    %166 = vmatpush1.msra.mxu0 %v63
    %167 = vmatprep.subr.mxu0 0.0
    %168 = vmatpush1.msra.mxu0 %v64
    %169 = vmatprep.subr.mxu0 0.0
    %170 = vmatpush1.msra.mxu0 %v65
    %171 = vmatprep.subr.mxu0 0.0
    %172 = vmatpush1.msra.mxu0 %v66
    %173 = vmatprep.subr.mxu0 0.0
    %174 = vmatpush1.msra.mxu0 %v67
    %175 = vmatprep.subr.mxu0 0.0
    %176 = vmatpush1.msra.mxu0 %v68
    %177 = vmatprep.subr.mxu0 0.0
    %178 = vmatpush1.msra.mxu0 %v69
    %179 = vmatprep.subr.mxu0 0.0
    %180 = vmatpush1.msra.mxu0 %v70
    %181 = vmatprep.subr.mxu0 0.0
    %182 = vmatpush1.msra.mxu0 %v71
    %183 = vmatprep.subr.mxu0 0.0
    %184 = vmatpush1.msra.mxu0 %v72
    %185 = vmatprep.subr.mxu0 0.0
    %186 = vmatpush1.msra.mxu0 %v73
    %187 = vmatprep.subr.mxu0 0.0
    %188 = vmatpush1.msra.mxu0 %v74
    %189 = vmatprep.subr.mxu0 0.0
    %190 = vmatpush1.msra.mxu0 %v75
    %191 = vmatprep.mubr.f32.mxu0 %v40
    %192 = vmatmul.mubr.f32.gmra.mrb[0].mxu0 %v39
    %v193 = vpop.f32.mrb[0].mxu0
    %v194 = vadd.f32 %v121, %v193
    %v195 = vpop.f32.mrb[0].mxu0
    %196 = vdwg.mxu0
    %197 = vmatprep.subr.mxu0 0.0
    %198 = vmatpush1.msra.mxu0 %v76
    %199 = vmatprep.subr.mxu0 0.0
    %200 = vmatpush1.msra.mxu0 %v77
    %201 = vmatprep.subr.mxu0 0.0
    %202 = vmatpush1.msra.mxu0 %v78
    %203 = vmatprep.subr.mxu0 0.0
    %204 = vmatpush1.msra.mxu0 %v79
    %205 = vmatprep.subr.mxu0 0.0
    %206 = vmatpush1.msra.mxu0 %v80
    %207 = vmatprep.subr.mxu0 0.0
    %208 = vmatpush1.msra.mxu0 %v81
    %209 = vmatprep.subr.mxu0 0.0
    %210 = vmatpush1.msra.mxu0 %v82
    %211 = vmatprep.subr.mxu0 0.0
    %212 = vmatpush1.msra.mxu0 %v83
    %213 = vmatprep.subr.mxu0 0.0
    %214 = vmatpush1.msra.mxu0 %v84
    %215 = vmatprep.subr.mxu0 0.0
    %216 = vmatpush1.msra.mxu0 %v85
    %217 = vmatprep.subr.mxu0 0.0
    %218 = vmatpush1.msra.mxu0 %v86
    %219 = vmatprep.subr.mxu0 0.0
    %220 = vmatpush1.msra.mxu0 %v87
    %221 = vmatprep.subr.mxu0 0.0
    %222 = vmatpush1.msra.mxu0 %v88
    %223 = vmatprep.subr.mxu0 0.0
    %224 = vmatpush1.msra.mxu0 %v89
    %225 = vmatprep.subr.mxu0 0.0
    %226 = vmatpush1.msra.mxu0 %v90
    %227 = vmatprep.subr.mxu0 0.0
    %228 = vmatpush1.msra.mxu0 %v91
    %229 = vmatprep.subr.mxu0 0.0
    %230 = vmatpush1.msra.mxu0 %v92
    %231 = vmatprep.subr.mxu0 0.0
    %232 = vmatpush1.msra.mxu0 %v93
    %233 = vmatprep.subr.mxu0 0.0
    %234 = vmatpush1.msra.mxu0 %v94
    %235 = vmatprep.subr.mxu0 0.0
    %236 = vmatpush1.msra.mxu0 %v95
    %237 = vmatprep.subr.mxu0 0.0
    %238 = vmatpush1.msra.mxu0 %v96
    %239 = vmatprep.subr.mxu0 0.0
    %240 = vmatpush1.msra.mxu0 %v97
    %241 = vmatprep.subr.mxu0 0.0
    %242 = vmatpush1.msra.mxu0 %v98
    %243 = vmatprep.subr.mxu0 0.0
    %244 = vmatpush1.msra.mxu0 %v99
    %245 = vmatprep.subr.mxu0 0.0
    %246 = vmatpush1.msra.mxu0 %v100
    %247 = vmatprep.subr.mxu0 0.0
    %248 = vmatpush1.msra.mxu0 %v101
    %249 = vmatprep.subr.mxu0 0.0
    %250 = vmatpush1.msra.mxu0 %v102
    %251 = vmatprep.subr.mxu0 0.0
    %252 = vmatpush1.msra.mxu0 %v103
    %253 = vmatprep.subr.mxu0 0.0
    %254 = vmatpush1.msra.mxu0 %v104
    %255 = vmatprep.subr.mxu0 0.0
    %256 = vmatpush1.msra.mxu0 %v105
    %257 = vmatprep.subr.mxu0 0.0
    %258 = vmatpush1.msra.mxu0 %v106
    %259 = vmatprep.subr.mxu0 0.0
    %260 = vmatpush1.msra.mxu0 %v107
    %261 = vmatprep.mubr.f32.mxu0 %v42
    %262 = vmatmul.mubr.f32.gmra.mrb[0].mxu0 %v41
    %v263 = vpop.f32.mrb[0].mxu0
    %v264 = vadd.f32 %v194, %v263
    %v265 = vpop.f32.mrb[0].mxu0
    %266 = vdwg.mxu0
    %267 = vmatprep.subr.mxu0 0.0
    %268 = vmatpush1.msra.mxu0 %v108
    %269 = vmatprep.subr.mxu0 0.0
    %270 = vmatpush1.msra.mxu0 %v109
    %271 = vmatprep.subr.mxu0 0.0
    %272 = vmatpush1.msra.mxu0 %v110
    %273 = vmatprep.subr.mxu0 0.0
    %274 = vmatpush1.msra.mxu0 %v111
    %275 = vmatprep.subr.mxu0 0.0
    %276 = vmatpush1.msra.mxu0 %v112
    %277 = vmatprep.subr.mxu0 0.0
    %278 = vmatpush1.msra.mxu0 %v113
    %279 = vmatprep.subr.mxu0 0.0
    %280 = vmatpush1.msra.mxu0 %v114
    %281 = vmatprep.subr.mxu0 0.0
    %282 = vmatpush1.msra.mxu0 %v115
    %283 = vmatprep.subr.mxu0 0.0
    %284 = vmatpush1.msra.mxu0 0.0
    %285 = vmatprep.subr.mxu0 0.0
    %286 = vmatpush1.msra.mxu0 0.0
    %287 = vmatprep.subr.mxu0 0.0
    %288 = vmatpush1.msra.mxu0 0.0
    %289 = vmatprep.subr.mxu0 0.0
    %290 = vmatpush1.msra.mxu0 0.0
    %291 = vmatprep.subr.mxu0 0.0
    %292 = vmatpush1.msra.mxu0 0.0
    %293 = vmatprep.subr.mxu0 0.0
    %294 = vmatpush1.msra.mxu0 0.0
    %295 = vmatprep.subr.mxu0 0.0
    %296 = vmatpush1.msra.mxu0 0.0
    %297 = vmatprep.subr.mxu0 0.0
    %298 = vmatpush1.msra.mxu0 0.0
    %299 = vmatprep.subr.mxu0 0.0
    %300 = vmatpush1.msra.mxu0 0.0
    %301 = vmatprep.subr.mxu0 0.0
    %302 = vmatpush1.msra.mxu0 0.0
    %303 = vmatprep.subr.mxu0 0.0
    %304 = vmatpush1.msra.mxu0 0.0
    %305 = vmatprep.subr.mxu0 0.0
    %306 = vmatpush1.msra.mxu0 0.0
    %307 = vmatprep.subr.mxu0 0.0
    %308 = vmatpush1.msra.mxu0 0.0
    %309 = vmatprep.subr.mxu0 0.0
    %310 = vmatpush1.msra.mxu0 0.0
    %311 = vmatprep.subr.mxu0 0.0
    %312 = vmatpush1.msra.mxu0 0.0
    %313 = vmatprep.subr.mxu0 0.0
    %314 = vmatpush1.msra.mxu0 0.0
    %315 = vmatprep.subr.mxu0 0.0
    %316 = vmatpush1.msra.mxu0 0.0
    %317 = vmatprep.subr.mxu0 0.0
    %318 = vmatpush1.msra.mxu0 0.0
    %319 = vmatprep.subr.mxu0 0.0
    %320 = vmatpush1.msra.mxu0 0.0
    %321 = vmatprep.subr.mxu0 0.0
    %322 = vmatpush1.msra.mxu0 0.0
    %323 = vmatprep.subr.mxu0 0.0
    %324 = vmatpush1.msra.mxu0 0.0
    %325 = vmatprep.subr.mxu0 0.0
    %326 = vmatpush1.msra.mxu0 0.0
    %327 = vmatprep.subr.mxu0 0.0
    %328 = vmatpush1.msra.mxu0 0.0
    %329 = vmatprep.subr.mxu0 0.0
    %330 = vmatpush1.msra.mxu0 0.0
    %331 = vmatprep.mubr.f32.mxu0 0.0
    %332 = vmatmul.mubr.f32.gmra.mrb[0].mxu0 %v125
    %v333 = vpop.f32.mrb[0].mxu0
    %v334 = vadd.f32 %v264, %v333
    %v335 = vpop.f32.mrb[0].mxu0
    %336 = vdwg.mxu0
    %v337 = vmax.f32 %v334, 0.0
    %v338 = vld [vmem:[%s3] sm:$0xff]
    %v339 = vld [vmem:[%s3 + $0x8] sm:$0xff]
    %v340 = vld [vmem:[%s3 + $0x10] sm:$0xff]
    %v341 = vld [vmem:[%s3 + $0x18] sm:$0xff]
    %v342 = vld [vmem:[%s3 + $0x20] sm:$0xff]
    %v343 = vld [vmem:[%s3 + $0x28] sm:$0xff]
    %v344 = vld [vmem:[%s3 + $0x30] sm:$0xff]
    %v345 = vld [vmem:[%s3 + $0x38] sm:$0xff]
    %v346 = vld [vmem:[%s3 + $0x40] sm:$0xff]
    %v347 = vld [vmem:[%s3 + $0x48] sm:$0xff]
    %v348 = vld [vmem:[%s3 + $0x50] sm:$0xff]
    %v349 = vld [vmem:[%s3 + $0x58] sm:$0xff]
    %v350 = vld [vmem:[%s3 + $0x60] sm:$0xff]
    %v351 = vld [vmem:[%s3 + $0x68] sm:$0xff]
    %v352 = vld [vmem:[%s3 + $0x70] sm:$0xff]
    %v353 = vld [vmem:[%s3 + $0x78] sm:$0xff]
    %v355 = vrot.slane %v337, 2
    %v356 = vsel %vm123, %v355, 0
    %358 = vmatprep.subr.mxu0 0.0
    %359 = vmatpush1.msra.mxu0 %v346
    %360 = vmatprep.subr.mxu0 0.0
    %361 = vmatpush1.msra.mxu0 %v347
    %362 = vmatprep.subr.mxu0 0.0
    %363 = vmatpush1.msra.mxu0 %v348
    %364 = vmatprep.subr.mxu0 0.0
    %365 = vmatpush1.msra.mxu0 %v349
    %366 = vmatprep.subr.mxu0 0.0
    %367 = vmatpush1.msra.mxu0 %v350
    %368 = vmatprep.subr.mxu0 0.0
    %369 = vmatpush1.msra.mxu0 %v351
    %370 = vmatprep.subr.mxu0 0.0
    %371 = vmatpush1.msra.mxu0 %v352
    %372 = vmatprep.subr.mxu0 0.0
    %373 = vmatpush1.msra.mxu0 %v353
    %374 = vmatprep.subr.mxu0 0.0
    %375 = vmatpush1.msra.mxu0 0.0
    %376 = vmatprep.subr.mxu0 0.0
    %377 = vmatpush1.msra.mxu0 0.0
    %378 = vmatprep.subr.mxu0 0.0
    %379 = vmatpush1.msra.mxu0 0.0
    %380 = vmatprep.subr.mxu0 0.0
    %381 = vmatpush1.msra.mxu0 0.0
    %382 = vmatprep.subr.mxu0 0.0
    %383 = vmatpush1.msra.mxu0 0.0
    %384 = vmatprep.subr.mxu0 0.0
    %385 = vmatpush1.msra.mxu0 0.0
    %386 = vmatprep.subr.mxu0 0.0
    %387 = vmatpush1.msra.mxu0 0.0
    %388 = vmatprep.subr.mxu0 0.0
    %389 = vmatpush1.msra.mxu0 0.0
    %390 = vmatprep.subr.mxu0 0.0
    %391 = vmatpush1.msra.mxu0 0.0
    %392 = vmatprep.subr.mxu0 0.0
    %393 = vmatpush1.msra.mxu0 0.0
    %394 = vmatprep.subr.mxu0 0.0
    %395 = vmatpush1.msra.mxu0 0.0
    %396 = vmatprep.subr.mxu0 0.0
    %397 = vmatpush1.msra.mxu0 0.0
    %398 = vmatprep.subr.mxu0 0.0
    %399 = vmatpush1.msra.mxu0 0.0
    %400 = vmatprep.subr.mxu0 0.0
    %401 = vmatpush1.msra.mxu0 0.0
    %402 = vmatprep.subr.mxu0 0.0
    %403 = vmatpush1.msra.mxu0 0.0
    %404 = vmatprep.subr.mxu0 0.0
    %405 = vmatpush1.msra.mxu0 0.0
    %406 = vmatprep.subr.mxu0 0.0
    %407 = vmatpush1.msra.mxu0 0.0
    %408 = vmatprep.subr.mxu0 0.0
    %409 = vmatpush1.msra.mxu0 0.0
    %410 = vmatprep.subr.mxu0 0.0
    %411 = vmatpush1.msra.mxu0 0.0
    %412 = vmatprep.subr.mxu0 0.0
    %413 = vmatpush1.msra.mxu0 0.0
    %414 = vmatprep.subr.mxu0 0.0
    %415 = vmatpush1.msra.mxu0 0.0
    %416 = vmatprep.subr.mxu0 0.0
    %417 = vmatpush1.msra.mxu0 0.0
    %418 = vmatprep.subr.mxu0 0.0
    %419 = vmatpush1.msra.mxu0 0.0
    %420 = vmatprep.subr.mxu0 0.0
    %421 = vmatpush1.msra.mxu0 0.0
    %422 = vmatprep.mubr.f32.mxu0 0.0
    %423 = vmatmul.mubr.f32.gmra.mrb[0].mxu0 %v356
    %v424 = vpop.f32.mrb[0].mxu0
    %v425 = vadd.f32 0.0, %v424
    %v426 = vpop.f32.mrb[0].mxu0
    %427 = vdwg.mxu0
    %v428 = vsel %vm123, %v337, 0
    %430 = vmatprep.subr.mxu0 0.0
    %431 = vmatpush1.msra.mxu0 %v338
    %432 = vmatprep.subr.mxu0 0.0
    %433 = vmatpush1.msra.mxu0 %v339
    %434 = vmatprep.subr.mxu0 0.0
    %435 = vmatpush1.msra.mxu0 %v340
    %436 = vmatprep.subr.mxu0 0.0
    %437 = vmatpush1.msra.mxu0 %v341
    %438 = vmatprep.subr.mxu0 0.0
    %439 = vmatpush1.msra.mxu0 %v342
    %440 = vmatprep.subr.mxu0 0.0
    %441 = vmatpush1.msra.mxu0 %v343
    %442 = vmatprep.subr.mxu0 0.0
    %443 = vmatpush1.msra.mxu0 %v344
    %444 = vmatprep.subr.mxu0 0.0
    %445 = vmatpush1.msra.mxu0 %v345
    %446 = vmatprep.subr.mxu0 0.0
    %447 = vmatpush1.msra.mxu0 0.0
    %448 = vmatprep.subr.mxu0 0.0
    %449 = vmatpush1.msra.mxu0 0.0
    %450 = vmatprep.subr.mxu0 0.0
    %451 = vmatpush1.msra.mxu0 0.0
    %452 = vmatprep.subr.mxu0 0.0
    %453 = vmatpush1.msra.mxu0 0.0
    %454 = vmatprep.subr.mxu0 0.0
    %455 = vmatpush1.msra.mxu0 0.0
    %456 = vmatprep.subr.mxu0 0.0
    %457 = vmatpush1.msra.mxu0 0.0
    %458 = vmatprep.subr.mxu0 0.0
    %459 = vmatpush1.msra.mxu0 0.0
    %460 = vmatprep.subr.mxu0 0.0
    %461 = vmatpush1.msra.mxu0 0.0
    %462 = vmatprep.subr.mxu0 0.0
    %463 = vmatpush1.msra.mxu0 0.0
    %464 = vmatprep.subr.mxu0 0.0
    %465 = vmatpush1.msra.mxu0 0.0
    %466 = vmatprep.subr.mxu0 0.0
    %467 = vmatpush1.msra.mxu0 0.0
    %468 = vmatprep.subr.mxu0 0.0
    %469 = vmatpush1.msra.mxu0 0.0
    %470 = vmatprep.subr.mxu0 0.0
    %471 = vmatpush1.msra.mxu0 0.0
    %472 = vmatprep.subr.mxu0 0.0
    %473 = vmatpush1.msra.mxu0 0.0
    %474 = vmatprep.subr.mxu0 0.0
    %475 = vmatpush1.msra.mxu0 0.0
    %476 = vmatprep.subr.mxu0 0.0
    %477 = vmatpush1.msra.mxu0 0.0
    %478 = vmatprep.subr.mxu0 0.0
    %479 = vmatpush1.msra.mxu0 0.0
    %480 = vmatprep.subr.mxu0 0.0
    %481 = vmatpush1.msra.mxu0 0.0
    %482 = vmatprep.subr.mxu0 0.0
    %483 = vmatpush1.msra.mxu0 0.0
    %484 = vmatprep.subr.mxu0 0.0
    %485 = vmatpush1.msra.mxu0 0.0
    %486 = vmatprep.subr.mxu0 0.0
    %487 = vmatpush1.msra.mxu0 0.0
    %488 = vmatprep.subr.mxu0 0.0
    %489 = vmatpush1.msra.mxu0 0.0
    %490 = vmatprep.subr.mxu0 0.0
    %491 = vmatpush1.msra.mxu0 0.0
    %492 = vmatprep.subr.mxu0 0.0
    %493 = vmatpush1.msra.mxu0 0.0
    %494 = vmatprep.mubr.f32.mxu0 0.0
    %495 = vmatmul.mubr.f32.gmra.mrb[0].mxu0 %v428
    %v496 = vpop.f32.mrb[0].mxu0
    %v497 = vadd.f32 %v425, %v496
    %v498 = vpop.f32.mrb[0].mxu0
    %499 = vdwg.mxu0
    %v500 = vld [vmem:[%s3 + $0x80] sm:$0xff]
    %v501 = vld [vmem:[%s3 + $0x88] sm:$0xff]
    %v502 = vld [vmem:[%s3 + $0x90] sm:$0xff]
    %v503 = vld [vmem:[%s3 + $0x98] sm:$0xff]
    %v504 = vld [vmem:[%s3 + $0xa0] sm:$0xff]
    %v505 = vld [vmem:[%s3 + $0xa8] sm:$0xff]
    %v506 = vld [vmem:[%s3 + $0xb0] sm:$0xff]
    %v507 = vld [vmem:[%s3 + $0xb8] sm:$0xff]
    %v508 = vrot.slane %v337, 4
    %v509 = vsel %vm123, %v508, 0
    %511 = vmatprep.subr.mxu0 0.0
    %512 = vmatpush1.msra.mxu0 %v500
    %513 = vmatprep.subr.mxu0 0.0
    %514 = vmatpush1.msra.mxu0 %v501
    %515 = vmatprep.subr.mxu0 0.0
    %516 = vmatpush1.msra.mxu0 %v502
    %517 = vmatprep.subr.mxu0 0.0
    %518 = vmatpush1.msra.mxu0 %v503
    %519 = vmatprep.subr.mxu0 0.0
    %520 = vmatpush1.msra.mxu0 %v504
    %521 = vmatprep.subr.mxu0 0.0
    %522 = vmatpush1.msra.mxu0 %v505
    %523 = vmatprep.subr.mxu0 0.0
    %524 = vmatpush1.msra.mxu0 %v506
    %525 = vmatprep.subr.mxu0 0.0
    %526 = vmatpush1.msra.mxu0 %v507
    %527 = vmatprep.subr.mxu0 0.0
    %528 = vmatpush1.msra.mxu0 0.0
    %529 = vmatprep.subr.mxu0 0.0
    %530 = vmatpush1.msra.mxu0 0.0
    %531 = vmatprep.subr.mxu0 0.0
    %532 = vmatpush1.msra.mxu0 0.0
    %533 = vmatprep.subr.mxu0 0.0
    %534 = vmatpush1.msra.mxu0 0.0
    %535 = vmatprep.subr.mxu0 0.0
    %536 = vmatpush1.msra.mxu0 0.0
    %537 = vmatprep.subr.mxu0 0.0
    %538 = vmatpush1.msra.mxu0 0.0
    %539 = vmatprep.subr.mxu0 0.0
    %540 = vmatpush1.msra.mxu0 0.0
    %541 = vmatprep.subr.mxu0 0.0
    %542 = vmatpush1.msra.mxu0 0.0
    %543 = vmatprep.subr.mxu0 0.0
    %544 = vmatpush1.msra.mxu0 0.0
    %545 = vmatprep.subr.mxu0 0.0
    %546 = vmatpush1.msra.mxu0 0.0
    %547 = vmatprep.subr.mxu0 0.0
    %548 = vmatpush1.msra.mxu0 0.0
    %549 = vmatprep.subr.mxu0 0.0
    %550 = vmatpush1.msra.mxu0 0.0
    %551 = vmatprep.subr.mxu0 0.0
    %552 = vmatpush1.msra.mxu0 0.0
    %553 = vmatprep.subr.mxu0 0.0
    %554 = vmatpush1.msra.mxu0 0.0
    %555 = vmatprep.subr.mxu0 0.0
    %556 = vmatpush1.msra.mxu0 0.0
    %557 = vmatprep.subr.mxu0 0.0
    %558 = vmatpush1.msra.mxu0 0.0
    %559 = vmatprep.subr.mxu0 0.0
    %560 = vmatpush1.msra.mxu0 0.0
    %561 = vmatprep.subr.mxu0 0.0
    %562 = vmatpush1.msra.mxu0 0.0
    %563 = vmatprep.subr.mxu0 0.0
    %564 = vmatpush1.msra.mxu0 0.0
    %565 = vmatprep.subr.mxu0 0.0
    %566 = vmatpush1.msra.mxu0 0.0
    %567 = vmatprep.subr.mxu0 0.0
    %568 = vmatpush1.msra.mxu0 0.0
    %569 = vmatprep.subr.mxu0 0.0
    %570 = vmatpush1.msra.mxu0 0.0
    %571 = vmatprep.subr.mxu0 0.0
    %572 = vmatpush1.msra.mxu0 0.0
    %573 = vmatprep.subr.mxu0 0.0
    %574 = vmatpush1.msra.mxu0 0.0
    %575 = vmatprep.mubr.f32.mxu0 0.0
    %576 = vmatmul.mubr.f32.gmra.mrb[0].mxu0 %v509
    %v577 = vpop.f32.mrb[0].mxu0
    %v578 = vadd.f32 0.0, %v577
    %v579 = vpop.f32.mrb[0].mxu0
    %580 = vdwg.mxu0
    %v581 = vadd.f32 %v497, %v578
    %v582 = vld [vmem:[%s3 + $0xc0] sm:$0xff]
    %v583 = vld [vmem:[%s3 + $0xc8] sm:$0xff]
    %v584 = vld [vmem:[%s3 + $0xd0] sm:$0xff]
    %v585 = vld [vmem:[%s3 + $0xd8] sm:$0xff]
    %v586 = vld [vmem:[%s3 + $0xe0] sm:$0xff]
    %v587 = vld [vmem:[%s3 + $0xe8] sm:$0xff]
    %v588 = vld [vmem:[%s3 + $0xf0] sm:$0xff]
    %v589 = vld [vmem:[%s3 + $0xf8] sm:$0xff]
    %v590 = vrot.slane %v337, 6
    %v591 = vsel %vm123, %v590, 0
    %593 = vmatprep.subr.mxu0 0.0
    %594 = vmatpush1.msra.mxu0 %v582
    %595 = vmatprep.subr.mxu0 0.0
    %596 = vmatpush1.msra.mxu0 %v583
    %597 = vmatprep.subr.mxu0 0.0
    %598 = vmatpush1.msra.mxu0 %v584
    %599 = vmatprep.subr.mxu0 0.0
    %600 = vmatpush1.msra.mxu0 %v585
    %601 = vmatprep.subr.mxu0 0.0
    %602 = vmatpush1.msra.mxu0 %v586
    %603 = vmatprep.subr.mxu0 0.0
    %604 = vmatpush1.msra.mxu0 %v587
    %605 = vmatprep.subr.mxu0 0.0
    %606 = vmatpush1.msra.mxu0 %v588
    %607 = vmatprep.subr.mxu0 0.0
    %608 = vmatpush1.msra.mxu0 %v589
    %609 = vmatprep.subr.mxu0 0.0
    %610 = vmatpush1.msra.mxu0 0.0
    %611 = vmatprep.subr.mxu0 0.0
    %612 = vmatpush1.msra.mxu0 0.0
    %613 = vmatprep.subr.mxu0 0.0
    %614 = vmatpush1.msra.mxu0 0.0
    %615 = vmatprep.subr.mxu0 0.0
    %616 = vmatpush1.msra.mxu0 0.0
    %617 = vmatprep.subr.mxu0 0.0
    %618 = vmatpush1.msra.mxu0 0.0
    %619 = vmatprep.subr.mxu0 0.0
    %620 = vmatpush1.msra.mxu0 0.0
    %621 = vmatprep.subr.mxu0 0.0
    %622 = vmatpush1.msra.mxu0 0.0
    %623 = vmatprep.subr.mxu0 0.0
    %624 = vmatpush1.msra.mxu0 0.0
    %625 = vmatprep.subr.mxu0 0.0
    %626 = vmatpush1.msra.mxu0 0.0
    %627 = vmatprep.subr.mxu0 0.0
    %628 = vmatpush1.msra.mxu0 0.0
    %629 = vmatprep.subr.mxu0 0.0
    %630 = vmatpush1.msra.mxu0 0.0
    %631 = vmatprep.subr.mxu0 0.0
    %632 = vmatpush1.msra.mxu0 0.0
    %633 = vmatprep.subr.mxu0 0.0
    %634 = vmatpush1.msra.mxu0 0.0
    %635 = vmatprep.subr.mxu0 0.0
    %636 = vmatpush1.msra.mxu0 0.0
    %637 = vmatprep.subr.mxu0 0.0
    %638 = vmatpush1.msra.mxu0 0.0
    %639 = vmatprep.subr.mxu0 0.0
    %640 = vmatpush1.msra.mxu0 0.0
    %641 = vmatprep.subr.mxu0 0.0
    %642 = vmatpush1.msra.mxu0 0.0
    %643 = vmatprep.subr.mxu0 0.0
    %644 = vmatpush1.msra.mxu0 0.0
    %645 = vmatprep.subr.mxu0 0.0
    %646 = vmatpush1.msra.mxu0 0.0
    %647 = vmatprep.subr.mxu0 0.0
    %648 = vmatpush1.msra.mxu0 0.0
    %649 = vmatprep.subr.mxu0 0.0
    %650 = vmatpush1.msra.mxu0 0.0
    %651 = vmatprep.subr.mxu0 0.0
    %652 = vmatpush1.msra.mxu0 0.0
    %653 = vmatprep.subr.mxu0 0.0
    %654 = vmatpush1.msra.mxu0 0.0
    %655 = vmatprep.subr.mxu0 0.0
    %656 = vmatpush1.msra.mxu0 0.0
    %657 = vmatprep.mubr.f32.mxu0 0.0
    %658 = vmatmul.mubr.f32.gmra.mrb[0].mxu0 %v591
    %v659 = vpop.f32.mrb[0].mxu0
    %v660 = vadd.f32 0.0, %v659
    %v661 = vpop.f32.mrb[0].mxu0
    %662 = vdwg.mxu0
    %v663 = vadd.f32 %v581, %v660
    %v664 = vld [vmem:[%s4] sm:$0x1]
    %v666 = vlaneseq
    %v667 = vshrl.u32 %v666, 7
    %v668 = vsub.s32 0, %v667
    %v669 = vrot.slane %v664, %v668
    %v671 = vadd.f32 %v663, %v669
    %v672 = vmax.f32 %v671, 0.0
    %v673 = vld [vmem:[%s5] sm:$0xff]
    %v674 = vld [vmem:[%s5 + $0x8] sm:$0xff]
    %v675 = vld [vmem:[%s5 + $0x10] sm:$0xff]
    %v676 = vld [vmem:[%s5 + $0x18] sm:$0xff]
    %v677 = vld [vmem:[%s5 + $0x20] sm:$0xff]
    %v678 = vld [vmem:[%s5 + $0x28] sm:$0xff]
    %v679 = vld [vmem:[%s5 + $0x30] sm:$0xff]
    %v680 = vld [vmem:[%s5 + $0x38] sm:$0xff]
    %v681 = vld [vmem:[%s6] sm:$0x1]
    %v683 = vlaneseq
    %v684 = vshrl.u32 %v683, 7
    %v685 = vsub.s32 0, %v684
    %v686 = vrot.slane %v681, %v685
    %v689 = vsel %vm123, %v672, 0
    %691 = vmatprep.subr.mxu0 0.0
    %692 = vmatpush1.msra.mxu0 %v673
    %693 = vmatprep.subr.mxu0 0.0
    %694 = vmatpush1.msra.mxu0 %v674
    %695 = vmatprep.subr.mxu0 0.0
    %696 = vmatpush1.msra.mxu0 %v675
    %697 = vmatprep.subr.mxu0 0.0
    %698 = vmatpush1.msra.mxu0 %v676
    %699 = vmatprep.subr.mxu0 0.0
    %700 = vmatpush1.msra.mxu0 %v677
    %701 = vmatprep.subr.mxu0 0.0
    %702 = vmatpush1.msra.mxu0 %v678
    %703 = vmatprep.subr.mxu0 0.0
    %704 = vmatpush1.msra.mxu0 %v679
    %705 = vmatprep.subr.mxu0 0.0
    %706 = vmatpush1.msra.mxu0 %v680
    %707 = vmatprep.subr.mxu0 0.0
    %708 = vmatpush1.msra.mxu0 0.0
    %709 = vmatprep.subr.mxu0 0.0
    %710 = vmatpush1.msra.mxu0 0.0
    %711 = vmatprep.subr.mxu0 0.0
    %712 = vmatpush1.msra.mxu0 0.0
    %713 = vmatprep.subr.mxu0 0.0
    %714 = vmatpush1.msra.mxu0 0.0
    %715 = vmatprep.subr.mxu0 0.0
    %716 = vmatpush1.msra.mxu0 0.0
    %717 = vmatprep.subr.mxu0 0.0
    %718 = vmatpush1.msra.mxu0 0.0
    %719 = vmatprep.subr.mxu0 0.0
    %720 = vmatpush1.msra.mxu0 0.0
    %721 = vmatprep.subr.mxu0 0.0
    %722 = vmatpush1.msra.mxu0 0.0
    %723 = vmatprep.subr.mxu0 0.0
    %724 = vmatpush1.msra.mxu0 0.0
    %725 = vmatprep.subr.mxu0 0.0
    %726 = vmatpush1.msra.mxu0 0.0
    %727 = vmatprep.subr.mxu0 0.0
    %728 = vmatpush1.msra.mxu0 0.0
    %729 = vmatprep.subr.mxu0 0.0
    %730 = vmatpush1.msra.mxu0 0.0
    %731 = vmatprep.subr.mxu0 0.0
    %732 = vmatpush1.msra.mxu0 0.0
    %733 = vmatprep.subr.mxu0 0.0
    %734 = vmatpush1.msra.mxu0 0.0
    %735 = vmatprep.subr.mxu0 0.0
    %736 = vmatpush1.msra.mxu0 0.0
    %737 = vmatprep.subr.mxu0 0.0
    %738 = vmatpush1.msra.mxu0 0.0
    %739 = vmatprep.subr.mxu0 0.0
    %740 = vmatpush1.msra.mxu0 0.0
    %741 = vmatprep.subr.mxu0 0.0
    %742 = vmatpush1.msra.mxu0 0.0
    %743 = vmatprep.subr.mxu0 0.0
    %744 = vmatpush1.msra.mxu0 0.0
    %745 = vmatprep.subr.mxu0 0.0
    %746 = vmatpush1.msra.mxu0 0.0
    %747 = vmatprep.subr.mxu0 0.0
    %748 = vmatpush1.msra.mxu0 0.0
    %749 = vmatprep.subr.mxu0 0.0
    %750 = vmatpush1.msra.mxu0 0.0
    %751 = vmatprep.subr.mxu0 0.0
    %752 = vmatpush1.msra.mxu0 0.0
    %753 = vmatprep.subr.mxu0 0.0
    %754 = vmatpush1.msra.mxu0 0.0
    %755 = vmatprep.mubr.f32.mxu0 0.0
    %756 = vmatmul.mubr.f32.gmra.mrb[0].mxu0 %v689
    %v757 = vpop.f32.mrb[0].mxu0
    %v758 = vadd.f32 %v686, %v757
    %v759 = vpop.f32.mrb[0].mxu0
    %760 = vdwg.mxu0
    %v761 = vmax.f32 %v758, 0.0
    %v762 = vld [vmem:[%s7] sm:$0xff]
    %v763 = vld [vmem:[%s7 + $0x8] sm:$0xff]
    %v764 = vld [vmem:[%s7 + $0x10] sm:$0xff]
    %v765 = vld [vmem:[%s7 + $0x18] sm:$0xff]
    %v766 = vld [vmem:[%s7 + $0x20] sm:$0xff]
    %v767 = vld [vmem:[%s7 + $0x28] sm:$0xff]
    %v768 = vld [vmem:[%s7 + $0x30] sm:$0xff]
    %v769 = vld [vmem:[%s7 + $0x38] sm:$0xff]
    %v770 = vld [vmem:[%s8] sm:$0x1]
    %v772 = vlaneseq
    %v773 = vshrl.u32 %v772, 7
    %v774 = vsub.s32 0, %v773
    %v775 = vrot.slane %v770, %v774
    %v778 = vsel %vm123, %v761, 0
    %780 = vmatprep.subr.mxu0 0.0
    %781 = vmatpush1.msra.mxu0 %v762
    %782 = vmatprep.subr.mxu0 0.0
    %783 = vmatpush1.msra.mxu0 %v763
    %784 = vmatprep.subr.mxu0 0.0
    %785 = vmatpush1.msra.mxu0 %v764
    %786 = vmatprep.subr.mxu0 0.0
    %787 = vmatpush1.msra.mxu0 %v765
    %788 = vmatprep.subr.mxu0 0.0
    %789 = vmatpush1.msra.mxu0 %v766
    %790 = vmatprep.subr.mxu0 0.0
    %791 = vmatpush1.msra.mxu0 %v767
    %792 = vmatprep.subr.mxu0 0.0
    %793 = vmatpush1.msra.mxu0 %v768
    %794 = vmatprep.subr.mxu0 0.0
    %795 = vmatpush1.msra.mxu0 %v769
    %796 = vmatprep.subr.mxu0 0.0
    %797 = vmatpush1.msra.mxu0 0.0
    %798 = vmatprep.subr.mxu0 0.0
    %799 = vmatpush1.msra.mxu0 0.0
    %800 = vmatprep.subr.mxu0 0.0
    %801 = vmatpush1.msra.mxu0 0.0
    %802 = vmatprep.subr.mxu0 0.0
    %803 = vmatpush1.msra.mxu0 0.0
    %804 = vmatprep.subr.mxu0 0.0
    %805 = vmatpush1.msra.mxu0 0.0
    %806 = vmatprep.subr.mxu0 0.0
    %807 = vmatpush1.msra.mxu0 0.0
    %808 = vmatprep.subr.mxu0 0.0
    %809 = vmatpush1.msra.mxu0 0.0
    %810 = vmatprep.subr.mxu0 0.0
    %811 = vmatpush1.msra.mxu0 0.0
    %812 = vmatprep.subr.mxu0 0.0
    %813 = vmatpush1.msra.mxu0 0.0
    %814 = vmatprep.subr.mxu0 0.0
    %815 = vmatpush1.msra.mxu0 0.0
    %816 = vmatprep.subr.mxu0 0.0
    %817 = vmatpush1.msra.mxu0 0.0
    %818 = vmatprep.subr.mxu0 0.0
    %819 = vmatpush1.msra.mxu0 0.0
    %820 = vmatprep.subr.mxu0 0.0
    %821 = vmatpush1.msra.mxu0 0.0
    %822 = vmatprep.subr.mxu0 0.0
    %823 = vmatpush1.msra.mxu0 0.0
    %824 = vmatprep.subr.mxu0 0.0
    %825 = vmatpush1.msra.mxu0 0.0
    %826 = vmatprep.subr.mxu0 0.0
    %827 = vmatpush1.msra.mxu0 0.0
    %828 = vmatprep.subr.mxu0 0.0
    %829 = vmatpush1.msra.mxu0 0.0
    %830 = vmatprep.subr.mxu0 0.0
    %831 = vmatpush1.msra.mxu0 0.0
    %832 = vmatprep.subr.mxu0 0.0
    %833 = vmatpush1.msra.mxu0 0.0
    %834 = vmatprep.subr.mxu0 0.0
    %835 = vmatpush1.msra.mxu0 0.0
    %836 = vmatprep.subr.mxu0 0.0
    %837 = vmatpush1.msra.mxu0 0.0
    %838 = vmatprep.subr.mxu0 0.0
    %839 = vmatpush1.msra.mxu0 0.0
    %840 = vmatprep.subr.mxu0 0.0
    %841 = vmatpush1.msra.mxu0 0.0
    %842 = vmatprep.subr.mxu0 0.0
    %843 = vmatpush1.msra.mxu0 0.0
    %844 = vmatprep.mubr.f32.mxu0 0.0
    %845 = vmatmul.mubr.f32.gmra.mrb[0].mxu0 %v778
    %v846 = vpop.f32.mrb[0].mxu0
    %v847 = vadd.f32 %v775, %v846
    %v848 = vpop.f32.mrb[0].mxu0
    %849 = vdwg.mxu0
    %v850 = vmax.f32 %v847, 0.0
    %v851 = vld [vmem:[%s9] sm:$0xff]
    %v852 = vld [vmem:[%s9 + $0x8] sm:$0xff]
    %v853 = vld [vmem:[%s9 + $0x10] sm:$0xff]
    %v854 = vld [vmem:[%s9 + $0x18] sm:$0xff]
    %v855 = vld [vmem:[%s9 + $0x20] sm:$0xff]
    %v856 = vld [vmem:[%s9 + $0x28] sm:$0xff]
    %v857 = vld [vmem:[%s9 + $0x30] sm:$0xff]
    %v858 = vld [vmem:[%s9 + $0x38] sm:$0xff]
    %v859 = vld [vmem:[%s9 + $0x40] sm:$0xff]
    %v860 = vld [vmem:[%s9 + $0x48] sm:$0xff]
    %v861 = vld [vmem:[%s9 + $0x50] sm:$0xff]
    %v862 = vld [vmem:[%s9 + $0x58] sm:$0xff]
    %v863 = vld [vmem:[%s9 + $0x60] sm:$0xff]
    %v864 = vld [vmem:[%s9 + $0x68] sm:$0xff]
    %v865 = vld [vmem:[%s9 + $0x70] sm:$0xff]
    %v866 = vld [vmem:[%s9 + $0x78] sm:$0xff]
    %v867 = vld [vmem:[%s10] sm:$0x1]
    %v869 = vlaneseq
    %v870 = vshrl.u32 %v869, 7
    %v871 = vsub.s32 0, %v870
    %v872 = vrot.slane %v867, %v871
    %874 = vmatprep.subr.mxu0 0.0
    %875 = vmatpush1.msra.mxu0 %v851
    %876 = vmatprep.subr.mxu0 0.0
    %877 = vmatpush1.msra.mxu0 %v852
    %878 = vmatprep.subr.mxu0 0.0
    %879 = vmatpush1.msra.mxu0 %v853
    %880 = vmatprep.subr.mxu0 0.0
    %881 = vmatpush1.msra.mxu0 %v854
    %882 = vmatprep.subr.mxu0 0.0
    %883 = vmatpush1.msra.mxu0 %v855
    %884 = vmatprep.subr.mxu0 0.0
    %885 = vmatpush1.msra.mxu0 %v856
    %886 = vmatprep.subr.mxu0 0.0
    %887 = vmatpush1.msra.mxu0 %v857
    %888 = vmatprep.subr.mxu0 0.0
    %889 = vmatpush1.msra.mxu0 %v858
    %890 = vmatprep.subr.mxu0 0.0
    %891 = vmatpush1.msra.mxu0 %v859
    %892 = vmatprep.subr.mxu0 0.0
    %893 = vmatpush1.msra.mxu0 %v860
    %894 = vmatprep.subr.mxu0 0.0
    %895 = vmatpush1.msra.mxu0 %v861
    %896 = vmatprep.subr.mxu0 0.0
    %897 = vmatpush1.msra.mxu0 %v862
    %898 = vmatprep.subr.mxu0 0.0
    %899 = vmatpush1.msra.mxu0 %v863
    %900 = vmatprep.subr.mxu0 0.0
    %901 = vmatpush1.msra.mxu0 %v864
    %902 = vmatprep.subr.mxu0 0.0
    %903 = vmatpush1.msra.mxu0 %v865
    %904 = vmatprep.subr.mxu0 0.0
    %905 = vmatpush1.msra.mxu0 %v866
    %906 = vmatprep.subr.mxu0 0.0
    %907 = vmatpush1.msra.mxu0 0.0
    %908 = vmatprep.subr.mxu0 0.0
    %909 = vmatpush1.msra.mxu0 0.0
    %910 = vmatprep.subr.mxu0 0.0
    %911 = vmatpush1.msra.mxu0 0.0
    %912 = vmatprep.subr.mxu0 0.0
    %913 = vmatpush1.msra.mxu0 0.0
    %914 = vmatprep.subr.mxu0 0.0
    %915 = vmatpush1.msra.mxu0 0.0
    %916 = vmatprep.subr.mxu0 0.0
    %917 = vmatpush1.msra.mxu0 0.0
    %918 = vmatprep.subr.mxu0 0.0
    %919 = vmatpush1.msra.mxu0 0.0
    %920 = vmatprep.subr.mxu0 0.0
    %921 = vmatpush1.msra.mxu0 0.0
    %922 = vmatprep.subr.mxu0 0.0
    %923 = vmatpush1.msra.mxu0 0.0
    %924 = vmatprep.subr.mxu0 0.0
    %925 = vmatpush1.msra.mxu0 0.0
    %926 = vmatprep.subr.mxu0 0.0
    %927 = vmatpush1.msra.mxu0 0.0
    %928 = vmatprep.subr.mxu0 0.0
    %929 = vmatpush1.msra.mxu0 0.0
    %930 = vmatprep.subr.mxu0 0.0
    %931 = vmatpush1.msra.mxu0 0.0
    %932 = vmatprep.subr.mxu0 0.0
    %933 = vmatpush1.msra.mxu0 0.0
    %934 = vmatprep.subr.mxu0 0.0
    %935 = vmatpush1.msra.mxu0 0.0
    %936 = vmatprep.subr.mxu0 0.0
    %937 = vmatpush1.msra.mxu0 0.0
    %938 = vmatprep.mubr.f32.mxu0 0.0
    %939 = vmatmul.mubr.f32.gmra.mrb[0].mxu0 %v850
    %v940 = vpop.f32.mrb[0].mxu0
    %v941 = vadd.f32 %v872, %v940
    %v942 = vpop.f32.mrb[0].mxu0
    %943 = vdwg.mxu0
    %vm944 = vcmask 41984
    %945 = vst.msk [vmem:[#allocation2] sm:$0x3] %vm944, %v941
    // Predicated region
    $region46: #{cdqn_forward.5} parent=1 // pred_check
      _
    $region47: #{cdqn_forward.5} parent=1 // pred_check_branch
      %947 = sbr.rel (0) target = $region49
    $region48: #{cdqn_forward.5} parent=1 // pred_region
      %s949 = ssub.s32 32, 32
      %950 = vsyncadd [#allocation3], %s949
      %s952 = sshll.u32 [#allocation2], 4
      %s953 = int_to_ptr.vmem [resolvable:$true] %s952
      %955 = dma.vmem_to_hbm [thread:$0]  %s953, 32, %s11, [#allocation3]
    $region49: #{cdqn_forward.5} parent=1 // pred_fallthru
      _
    // Predicated region
    $region50: #{cdqn_forward.5} parent=1 // pred_check
      _
    $region51: #{cdqn_forward.5} parent=1 // pred_check_branch
      %957 = sbr.rel (0) target = $region53
    $region52: #{cdqn_forward.5} parent=1 // pred_region
      %958 = dma.done [#allocation3], 32
    $region53: #{cdqn_forward.5} parent=1 // pred_fallthru
      _
    %959 = vsyncpa [#allocation3], 1

</llo_original>
